<compile_context>
chip_gen: v5e
topology: v5e:2x2
jax: 0.10.0
libtpu: 0.0.40
codegen_flags: <defaults>
</compile_context>

<pallas_src>
import jax
import jax.numpy as jnp
from jax.experimental import pallas as pl
from jax.experimental.pallas import tpu as pltpu


def _round_up(x, m):
    return ((x + m - 1) // m) * m


def _pose_seq_kernel(x_ref, we_ref, be_ref, wl_ref, bl_ref, wd_ref, bd_ref,
                     head_ref, acc_ref):
    """grid = (Din_pad // TK,): reduction over the flattened-image feature axis.

    x_ref  : (Np, TK)      bf16  current K-slab of flattened frames
    we_ref : (TK, ENCp)    bf16  current K-slab of encoder weight
    acc_ref: (Np, ENCp)    f32   running encoder accumulator (VMEM scratch)
    On the last K step the small downstream layers run and the single
    lane-dense (Np, HEADp) fused-head output is stored.
    """
    k = pl.program_id(0)

    @pl.when(k == 0)
    def _():
        acc_ref[...] = jnp.zeros_like(acc_ref)

    # Encoder matmul slab: bf16 operands, f32 accumulation on the MXU.
    acc_ref[...] += jnp.dot(x_ref[...], we_ref[...],
                            preferred_element_type=jnp.float32)

    @pl.when(k == pl.num_programs(0) - 1)
    def _():
        # linear(relu(encoder(x)))  -- f32 epilogue (small matmuls).
        enc = acc_ref[...] + be_ref[...]
        feats = jnp.dot(jnp.maximum(enc, 0.0), wl_ref[...],
                        preferred_element_type=jnp.float32) + bl_ref[...]
        # Fused decoder heads: [betas | poses | pad] in one lane-dense store.
        head_ref[...] = jnp.dot(feats, wd_ref[...],
                                preferred_element_type=jnp.float32) + bd_ref[...]


def pose_seq_net_xtreme3(images, params, *, dim_beta=10, dim_pose=72):
    """images: (B, S, 3, H, W) float32.  Returns (beta, poses):
       beta  (B, S, dim_beta)  -- per-sequence mean of betas, expanded over S
       poses (B, S, dim_pose)
    """
    B, S, C, H, W = images.shape
    N = B * S
    Din = C * H * W

    (we, be, wl, bl, wb, bb, wp, bp) = params
    enc_out = we.shape[1]
    dim_z = wl.shape[1]

    f32, bf16 = jnp.float32, jnp.bfloat16

    # ---- padding / tiling choices ---------------------------------------
    ENCp = _round_up(enc_out, 128)            # lane-align encoder output (1000 -> 1024)
    HEAD = dim_beta + dim_pose
    HEADp = _round_up(HEAD, 128)              # lane-dense fused decoder output (82 -> 128)
    Np = _round_up(N, 8)                      # sublane-align rows

    # K tile: large slabs (~4 MiB bf16/buffer) for realistic Din so the pipeline
    # stays near the HBM roofline, small tile for tiny Din; safe on v5e/v6e/v7x.
    TK = 2048 if Din >= 2048 else 256
    Dinp = _round_up(Din, TK)
    n_k = Dinp // TK
    # TODO(synk): for very large B*S (v7x dual TensorCore) add a second
    # 'parallel' grid axis over row tiles in addition to this 'arbitrary' K axis.

    # ---- host-side packing / casting ------------------------------------
    x = images.reshape(N, Din).astype(f32)
    x = jnp.pad(x, ((0, Np - N), (0, Dinp - Din))).astype(bf16)

    we_p = jnp.pad(we.astype(f32),
                   ((0, Dinp - Din), (0, ENCp - enc_out))).astype(bf16)
    be_p = jnp.pad(be.reshape(1, -1).astype(f32), ((0, 0), (0, ENCp - enc_out)))
    wl_p = jnp.pad(wl.astype(f32), ((0, ENCp - enc_out), (0, 0)))
    bl_p = bl.reshape(1, -1).astype(f32)

    # Fused decoder heads: wd = [wb | wp] padded to HEADp lanes.
    wd = jnp.concatenate([wb.astype(f32), wp.astype(f32)], axis=1)
    bd = jnp.concatenate([bb.reshape(1, -1).astype(f32),
                          bp.reshape(1, -1).astype(f32)], axis=1)
    wd_p = jnp.pad(wd, ((0, 0), (0, HEADp - HEAD)))
    bd_p = jnp.pad(bd, ((0, 0), (0, HEADp - HEAD)))

    flops = 2 * Np * (Dinp * ENCp + ENCp * dim_z + dim_z * HEADp)
    bytes_accessed = (x.size * 2 + we_p.size * 2
                      + 4 * (be_p.size + wl_p.size + bl_p.size
                             + wd_p.size + bd_p.size)
                      + 4 * Np * HEADp)

    head = pl.pallas_call(
        _pose_seq_kernel,
        out_shape=jax.ShapeDtypeStruct((Np, HEADp), f32),
        grid_spec=pltpu.PrefetchScalarGridSpec(
            num_scalar_prefetch=0,
            grid=(n_k,),
            in_specs=[
                pl.BlockSpec((Np, TK), lambda k: (0, k)),        # x   K-slab (bf16)
                pl.BlockSpec((TK, ENCp), lambda k: (k, 0)),      # we  K-slab (bf16)
                pl.BlockSpec((1, ENCp), lambda k: (0, 0)),       # be
                pl.BlockSpec((ENCp, dim_z), lambda k: (0, 0)),   # wl
                pl.BlockSpec((1, dim_z), lambda k: (0, 0)),      # bl
                pl.BlockSpec((dim_z, HEADp), lambda k: (0, 0)),  # wd (fused heads)
                pl.BlockSpec((1, HEADp), lambda k: (0, 0)),      # bd (fused heads)
            ],
            out_specs=pl.BlockSpec((Np, HEADp), lambda k: (0, 0)),
            scratch_shapes=[pltpu.VMEM((Np, ENCp), f32)],
        ),
        compiler_params=pltpu.CompilerParams(
            dimension_semantics=("arbitrary",),
            vmem_limit_bytes=32 * 1024 * 1024,
        ),
        cost_estimate=pl.CostEstimate(
            flops=flops, transcendentals=0, bytes_accessed=bytes_accessed),
    )(x, we_p, be_p, wl_p, bl_p, wd_p, bd_p)

    # ---- glue: unpad, split heads, per-sequence mean of betas ------------
    head = head[:N]
    betas = head[:, :dim_beta].reshape(B, S, dim_beta)
    poses = head[:, dim_beta:dim_beta + dim_pose].reshape(B, S, dim_pose)
    beta = jnp.broadcast_to(jnp.mean(betas, axis=1, keepdims=True),
                            (B, S, dim_beta))
    return beta, poses


def init_params(key, Din, enc_out=1000, dim_z=128, dim_beta=10, dim_pose=72):
    ks = jax.random.split(key, 8)
    scale = 0.02
    we = scale * jax.random.normal(ks[0], (Din, enc_out), jnp.float32)
    be = scale * jax.random.normal(ks[1], (1, enc_out), jnp.float32)
    wl = scale * jax.random.normal(ks[2], (enc_out, dim_z), jnp.float32)
    bl = scale * jax.random.normal(ks[3], (1, dim_z), jnp.float32)
    wb = scale * jax.random.normal(ks[4], (dim_z, dim_beta), jnp.float32)
    bb = scale * jax.random.normal(ks[5], (1, dim_beta), jnp.float32)
    wp = scale * jax.random.normal(ks[6], (dim_z, dim_pose), jnp.float32)
    bp = scale * jax.random.normal(ks[7], (1, dim_pose), jnp.float32)
    return (we, be, wl, bl, wb, bb, wp, bp)


if __name__ == "__main__":
    key = jax.random.PRNGKey(0)
    k_img, k_par = jax.random.split(key)

    B, S, C, H, W = 2, 8, 3, 16, 16
    images = jax.random.normal(k_img, (B, S, C, H, W), jnp.float32)
    params = init_params(k_par, Din=C * H * W)

    beta, poses = jax.jit(lambda im: pose_seq_net_xtreme3(im, params))(images)
    jax.block_until_ready((beta, poses))

    # Pure-JAX reference of the same forward pass (same bf16 cast for the
    # encoder matmul operands, f32 accumulation) for numerical comparison.
    we, be, wl, bl, wb, bb, wp, bp = params
    x = images.reshape(B * S, -1)
    enc = jnp.dot(x.astype(jnp.bfloat16), we.astype(jnp.bfloat16),
                  preferred_element_type=jnp.float32) + be
    feats = jnp.maximum(enc, 0.0) @ wl + bl
    betas_ref = (feats @ wb + bb).reshape(B, S, -1)
    poses_ref = (feats @ wp + bp).reshape(B, S, -1)
    beta_ref = jnp.broadcast_to(betas_ref.mean(axis=1, keepdims=True),
                                betas_ref.shape)

    assert beta.shape == (B, S, 10) and poses.shape == (B, S, 72)
    assert bool(jnp.all(jnp.isfinite(beta))) and bool(jnp.all(jnp.isfinite(poses)))
    assert jnp.allclose(beta, beta_ref, atol=2e-3, rtol=2e-3)
    assert jnp.allclose(poses, poses_ref, atol=2e-3, rtol=2e-3)

    print("KERNEL_OK")
</pallas_src>

<mosaic_0001>
module attributes {stable_mosaic.version = 11 : i64} {
  func.func @_pose_seq_kernel(%arg0: i32, %arg1: memref<16x256xbf16, #tpu.memory_space<vmem>>, %arg2: memref<256x1024xbf16, #tpu.memory_space<vmem>>, %arg3: memref<1x1024xf32, #tpu.memory_space<vmem>>, %arg4: memref<1024x128xf32, #tpu.memory_space<vmem>>, %arg5: memref<1x128xf32, #tpu.memory_space<vmem>>, %arg6: memref<128x128xf32, #tpu.memory_space<vmem>>, %arg7: memref<1x128xf32, #tpu.memory_space<vmem>>, %arg8: memref<16x128xf32, #tpu.memory_space<vmem>>, %arg9: memref<16x1024xf32, #tpu.memory_space<vmem>>) attributes {dimension_semantics = [#tpu.dimension_semantics<arbitrary>], iteration_bounds = array<i64: 3>, scalar_prefetch = 0 : i64, scratch_operands = 1 : i64, tpu.core_type = #tpu.core_type<tc>, window_params = [{transform_indices = @transform_0, window_bounds = array<i64: 16, 256>}, {transform_indices = @transform_1, window_bounds = array<i64: 256, 1024>}, {pipeline_mode = #tpu.pipeline_mode<synchronous>, transform_indices = @transform_2, window_bounds = array<i64: 1, 1024>}, {pipeline_mode = #tpu.pipeline_mode<synchronous>, transform_indices = @transform_3, window_bounds = array<i64: 1024, 128>}, {pipeline_mode = #tpu.pipeline_mode<synchronous>, transform_indices = @transform_4, window_bounds = array<i64: 1, 128>}, {pipeline_mode = #tpu.pipeline_mode<synchronous>, transform_indices = @transform_5, window_bounds = array<i64: 128, 128>}, {pipeline_mode = #tpu.pipeline_mode<synchronous>, transform_indices = @transform_6, window_bounds = array<i64: 1, 128>}, {pipeline_mode = #tpu.pipeline_mode<synchronous>, transform_indices = @transform_7, window_bounds = array<i64: 16, 128>}]} {
    %c0_i32 = arith.constant 0 : i32
    %0 = arith.cmpi eq, %arg0, %c0_i32 : i32
    %1 = arith.extui %0 : i1 to i32
    %c0_i32_0 = arith.constant 0 : i32
    %2 = arith.cmpi ne, %1, %c0_i32_0 : i32
    scf.if %2 {
      %cst_9 = arith.constant 0.000000e+00 : f32
      %12 = vector.broadcast %cst_9 : f32 to vector<16x1024xf32>
      %c0_10 = arith.constant 0 : index
      %c0_11 = arith.constant 0 : index
      %13 = vector.load %arg9[%c0_10, %c0_11] : memref<16x1024xf32, #tpu.memory_space<vmem>>, vector<16x1024xf32>
      tpu.vector_store %arg9[%c0_10, %c0_11], %12 {strides = array<i32>} : memref<16x1024xf32, #tpu.memory_space<vmem>>, vector<16x1024xf32>,
    } else {
    }
    %c0 = arith.constant 0 : index
    %c0_1 = arith.constant 0 : index
    %3 = vector.load %arg9[%c0, %c0_1] : memref<16x1024xf32, #tpu.memory_space<vmem>>, vector<16x1024xf32>
    %c0_2 = arith.constant 0 : index
    %c0_3 = arith.constant 0 : index
    %4 = vector.load %arg1[%c0_2, %c0_3] : memref<16x256xbf16, #tpu.memory_space<vmem>>, vector<16x256xbf16>
    %c0_4 = arith.constant 0 : index
    %c0_5 = arith.constant 0 : index
    %5 = vector.load %arg2[%c0_4, %c0_5] : memref<256x1024xbf16, #tpu.memory_space<vmem>>, vector<256x1024xbf16>
    %cst = arith.constant dense<0.000000e+00> : vector<16x1024xf32>
    %6 = tpu.matmul %4, %5, %cst {dimension_numbers = #tpu.dot_dimension_numbers<[1], [0], [0], [1], [0, 0, 1, 1], [], []>} : vector<16x256xbf16>, vector<256x1024xbf16>, vector<16x1024xf32> -> vector<16x1024xf32>
    %7 = arith.addf %3, %6 : vector<16x1024xf32>
    %c0_6 = arith.constant 0 : index
    %c0_7 = arith.constant 0 : index
    %8 = vector.load %arg9[%c0_6, %c0_7] : memref<16x1024xf32, #tpu.memory_space<vmem>>, vector<16x1024xf32>
    tpu.vector_store %arg9[%c0_6, %c0_7], %7 {strides = array<i32>} : memref<16x1024xf32, #tpu.memory_space<vmem>>, vector<16x1024xf32>,
    %c2_i32 = arith.constant 2 : i32
    %9 = arith.cmpi eq, %arg0, %c2_i32 : i32
    %10 = arith.extui %9 : i1 to i32
    %c0_i32_8 = arith.constant 0 : i32
    %11 = arith.cmpi ne, %10, %c0_i32_8 : i32
    scf.if %11 {
      %c0_9 = arith.constant 0 : index
      %c0_10 = arith.constant 0 : index
      %12 = vector.load %arg9[%c0_9, %c0_10] : memref<16x1024xf32, #tpu.memory_space<vmem>>, vector<16x1024xf32>
      %c0_11 = arith.constant 0 : index
      %c0_12 = arith.constant 0 : index
      %13 = vector.load %arg3[%c0_11, %c0_12] : memref<1x1024xf32, #tpu.memory_space<vmem>>, vector<1x1024xf32>
      %14 = vector.broadcast %13 : vector<1x1024xf32> to vector<16x1024xf32>
      %15 = arith.addf %12, %14 : vector<16x1024xf32>
      %cst_13 = arith.constant 0.000000e+00 : f32
      %16 = vector.broadcast %cst_13 : f32 to vector<16x1024xf32>
      %17 = arith.maximumf %15, %16 : vector<16x1024xf32>
      %c0_14 = arith.constant 0 : index
      %c0_15 = arith.constant 0 : index
      %18 = vector.load %arg4[%c0_14, %c0_15] : memref<1024x128xf32, #tpu.memory_space<vmem>>, vector<1024x128xf32>
      %cst_16 = arith.constant dense<0.000000e+00> : vector<16x128xf32>
      %19 = tpu.matmul %17, %18, %cst_16 {dimension_numbers = #tpu.dot_dimension_numbers<[1], [0], [0], [1], [0, 0, 1, 1], [], []>} : vector<16x1024xf32>, vector<1024x128xf32>, vector<16x128xf32> -> vector<16x128xf32>
      %c0_17 = arith.constant 0 : index
      %c0_18 = arith.constant 0 : index
      %20 = vector.load %arg5[%c0_17, %c0_18] : memref<1x128xf32, #tpu.memory_space<vmem>>, vector<1x128xf32>
      %21 = vector.broadcast %20 : vector<1x128xf32> to vector<16x128xf32>
      %22 = arith.addf %19, %21 : vector<16x128xf32>
      %c0_19 = arith.constant 0 : index
      %c0_20 = arith.constant 0 : index
      %23 = vector.load %arg6[%c0_19, %c0_20] : memref<128x128xf32, #tpu.memory_space<vmem>>, vector<128x128xf32>
      %cst_21 = arith.constant dense<0.000000e+00> : vector<16x128xf32>
      %24 = tpu.matmul %22, %23, %cst_21 {dimension_numbers = #tpu.dot_dimension_numbers<[1], [0], [0], [1], [0, 0, 1, 1], [], []>} : vector<16x128xf32>, vector<128x128xf32>, vector<16x128xf32> -> vector<16x128xf32>
      %c0_22 = arith.constant 0 : index
      %c0_23 = arith.constant 0 : index
      %25 = vector.load %arg7[%c0_22, %c0_23] : memref<1x128xf32, #tpu.memory_space<vmem>>, vector<1x128xf32>
      %26 = vector.broadcast %25 : vector<1x128xf32> to vector<16x128xf32>
      %27 = arith.addf %24, %26 : vector<16x128xf32>
      %c0_24 = arith.constant 0 : index
      %c0_25 = arith.constant 0 : index
      %28 = vector.load %arg8[%c0_24, %c0_25] : memref<16x128xf32, #tpu.memory_space<vmem>>, vector<16x128xf32>
      tpu.vector_store %arg8[%c0_24, %c0_25], %27 {strides = array<i32>} : memref<16x128xf32, #tpu.memory_space<vmem>>, vector<16x128xf32>,
    } else {
    }
    return
  }
  func.func @transform_0(%arg0: i32) -> (i32, i32) {
    %c0_i32 = arith.constant 0 : i32
    %c0_i32_0 = arith.constant 0 : i32
    return %c0_i32, %arg0 : i32, i32
  }
  func.func @transform_1(%arg0: i32) -> (i32, i32) {
    %c0_i32 = arith.constant 0 : i32
    %c0_i32_0 = arith.constant 0 : i32
    return %arg0, %c0_i32 : i32, i32
  }
  func.func @transform_2(%arg0: i32) -> (i32, i32) {
    %c0_i32 = arith.constant 0 : i32
    %c0_i32_0 = arith.constant 0 : i32
    %c0_i32_1 = arith.constant 0 : i32
    return %c0_i32, %c0_i32_0 : i32, i32
  }
  func.func @transform_3(%arg0: i32) -> (i32, i32) {
    %c0_i32 = arith.constant 0 : i32
    %c0_i32_0 = arith.constant 0 : i32
    %c0_i32_1 = arith.constant 0 : i32
    return %c0_i32, %c0_i32_0 : i32, i32
  }
  func.func @transform_4(%arg0: i32) -> (i32, i32) {
    %c0_i32 = arith.constant 0 : i32
    %c0_i32_0 = arith.constant 0 : i32
    %c0_i32_1 = arith.constant 0 : i32
    return %c0_i32, %c0_i32_0 : i32, i32
  }
  func.func @transform_5(%arg0: i32) -> (i32, i32) {
    %c0_i32 = arith.constant 0 : i32
    %c0_i32_0 = arith.constant 0 : i32
    %c0_i32_1 = arith.constant 0 : i32
    return %c0_i32, %c0_i32_0 : i32, i32
  }
  func.func @transform_6(%arg0: i32) -> (i32, i32) {
    %c0_i32 = arith.constant 0 : i32
    %c0_i32_0 = arith.constant 0 : i32
    %c0_i32_1 = arith.constant 0 : i32
    return %c0_i32, %c0_i32_0 : i32, i32
  }
  func.func @transform_7(%arg0: i32) -> (i32, i32) {
    %c0_i32 = arith.constant 0 : i32
    %c0_i32_0 = arith.constant 0 : i32
    %c0_i32_1 = arith.constant 0 : i32
    return %c0_i32, %c0_i32_0 : i32, i32
  }
}

</mosaic_0001>

<llo_original>
// kernel: _lambda_.1
$region0: #{_lambda_.1}
  #allocation0 [shape = 'u32[]', space=smem, size = 0x4, offset = 0x4, fixed_abs, tag = 'smem constant byte address 0x4 - core index']
  #allocation1 [shape = 'u32[72,128]{1,0:T(1,128)}', space=vmem, size = 0x9000, scoped, tag = 'internal scratch']
  #allocation2 [shape = 'f32[16,1024]{1,0:T(8,128)}', space=vmem, size = 0x10000, scoped, tag = 'scratch operand']
  %s0 = inlined_call_operand.vmem [shape: bf16[16,768], index: 0, kind: input, shape index: {}]
  %s1 = inlined_call_operand.hbm [shape: bf16[768,1024], index: 1, kind: input, shape index: {}]
  %s2 = inlined_call_operand.hbm [shape: f32[1,1024], index: 2, kind: input, shape index: {}]
  %s3 = inlined_call_operand.hbm [shape: f32[1024,128], index: 3, kind: input, shape index: {}]
  %s4 = inlined_call_operand.hbm [shape: f32[1,128], index: 4, kind: input, shape index: {}]
  %s5 = inlined_call_operand.hbm [shape: f32[128,128], index: 5, kind: input, shape index: {}]
  %s6 = inlined_call_operand.hbm [shape: f32[1,128], index: 6, kind: input, shape index: {}]
  %s7 = inlined_call_operand.vmem [shape: f32[16,128], index: 7, kind: output, shape index: {}]
  %s8 = sld [smem:[#allocation0]]
  $region131: #{_lambda_.1} parent=0
    _
  %s10 = ssub.s32 1, %s8
  %s11 = scalar_select 0, %s10, %s8
  $region1: #{_lambda_.1} parent=0
    #allocation3 [shape = 'u8[16384]{0}', space=vmem, size = 0x4000, scoped, tag = 'input window, operand 0']
    #allocation4 [shape = 'u8[1048576]{0}', space=vmem, size = 0x100000, scoped, tag = 'input window, operand 1']
    #allocation5 [shape = 's32[2]{0}', space=sflag, size = 0x8, scoped, tag = 'scoped memory for _lambda_.1']
    #allocation6 [shape = 'u8[4096]{0}', space=vmem, size = 0x1000, scoped, tag = 'input window, operand 2, single buffered']
    #allocation7 [shape = 's32[1]{0}', space=sflag, size = 0x4, scoped, tag = 'scoped memory for _lambda_.1']
    #allocation8 [shape = 'u8[524288]{0}', space=vmem, size = 0x80000, scoped, tag = 'input window, operand 3, single buffered']
    #allocation9 [shape = 'u8[512]{0}', space=vmem, size = 0x400, scoped, tag = 'input window, operand 4, single buffered']
    #allocation10 [shape = 's32[1]{0}', space=sflag, size = 0x4, scoped, tag = 'scoped memory for _lambda_.1']
    #allocation11 [shape = 'u8[65536]{0}', space=vmem, size = 0x10000, scoped, tag = 'input window, operand 5, single buffered']
    #allocation12 [shape = 'u8[512]{0}', space=vmem, size = 0x400, scoped, tag = 'input window, operand 6, single buffered']
    #allocation13 [shape = 's32[1]{0}', space=sflag, size = 0x4, scoped, tag = 'scoped memory for _lambda_.1']
    %12 = vsyncpa [#allocation5], 0
    %s13 = scalar_lea.sflag [#allocation5], 1
    %14 = vsyncpa %s13, 0
    %15 = vsyncpa [#allocation7], 0
    %16 = vsyncpa [#allocation10], 0
    %17 = vsyncpa [#allocation13], 0
    loop: start=0, step=1, limit=5
    $region2: #{_lambda_.1} parent=1 // loop_pre_header
      _
    $region3: #{_lambda_.1} parent=1 // loop_header
      %s19 = sphi 0, %s23
      %p20 = scmp.ge.s32.totalorder %s19, 5
      %s29 = sphi 0, %s31
      %s32 = sphi 0, %s29
      %s33 = sphi 0, %s32
      %s49 = sphi 0, %s33
      %s55 = sphi 0, %s57
      %s58 = sphi 0, %s55
      %s59 = sphi 0, %s58
      %s75 = sphi 0, %s59
      %s79 = sphi 0, %s79
      %s81 = sphi 0, %s79
      %s82 = sphi 0, %s81
      %s96 = sphi 0, %s82
      %s100 = sphi 0, %s100
      %s102 = sphi 0, %s100
      %s103 = sphi 0, %s102
      %s117 = sphi 0, %s103
      %s121 = sphi 0, %s121
      %s123 = sphi 0, %s121
      %s124 = sphi 0, %s123
      %s138 = sphi 0, %s124
      %s142 = sphi 0, %s142
      %s144 = sphi 0, %s142
      %s145 = sphi 0, %s144
      %s159 = sphi 0, %s145
      %s163 = sphi 0, %s163
      %s165 = sphi 0, %s163
      %s166 = sphi 0, %s165
      %s180 = sphi 0, %s166
      %s184 = sphi 0, %s184
      %s186 = sphi 0, %s184
      %s187 = sphi 0, %s186
      %s201 = sphi 0, %s187
    $region4: #{_lambda_.1} parent=1 // loop_header_branch
      %22 = sbr.rel (%p20) target = $region8
    $region5: #{_lambda_.1} parent=1 // loop_body
      %s24 = ssub.s32 %s19, 1
      %s25 = ssub.s32 %s19, 2
      %s26 = sadd.s32 %s19, 1
      %s27 = ssub.s32 %s19, %s26
      %p28 = scmp.eq.s32.totalorder %s27, 0
      %s30 = sadd.s32 %s29, 1
      %s31 = scalar_select %p28, %s29, %s30
      %p34 = pneg %p28
      %p35 = scmp.eq.s32.totalorder %s19, 2
      %p36 = por %p34, %p35
      %p37 = scmp.ne.s32.totalorder %s29, %s32
      %p38 = scmp.eq.s32.totalorder %s19, 0
      %p39 = por %p37, %p38
      %p40 = scmp.ne.s32.totalorder %s29, %s32
      %p41 = scmp.eq.s32.totalorder %s24, 2
      %p42 = por %p40, %p41
      %p43 = scmp.ne.s32.totalorder %s32, %s33
      %p44 = scmp.eq.s32.totalorder %s24, 0
      %p45 = por %p43, %p44
      %p46 = scmp.ne.s32.totalorder %s32, %s33
      %p47 = scmp.eq.s32.totalorder %s25, 2
      %p48 = por %p46, %p47
      %p50 = scmp.ne.s32.totalorder %s33, %s49
      %p51 = scmp.eq.s32.totalorder %s25, 0
      %p52 = por %p50, %p51
      %s53 = ssub.s32 %s19, %s26
      %p54 = scmp.eq.s32.totalorder %s53, 0
      %s56 = sadd.s32 %s55, 1
      %s57 = scalar_select %p54, %s55, %s56
      %p60 = pneg %p54
      %p61 = scmp.eq.s32.totalorder %s19, 2
      %p62 = por %p60, %p61
      %p63 = scmp.ne.s32.totalorder %s55, %s58
      %p64 = scmp.eq.s32.totalorder %s19, 0
      %p65 = por %p63, %p64
      %p66 = scmp.ne.s32.totalorder %s55, %s58
      %p67 = scmp.eq.s32.totalorder %s24, 2
      %p68 = por %p66, %p67
      %p69 = scmp.ne.s32.totalorder %s58, %s59
      %p70 = scmp.eq.s32.totalorder %s24, 0
      %p71 = por %p69, %p70
      %p72 = scmp.ne.s32.totalorder %s58, %s59
      %p73 = scmp.eq.s32.totalorder %s25, 2
      %p74 = por %p72, %p73
      %p76 = scmp.ne.s32.totalorder %s59, %s75
      %p77 = scmp.eq.s32.totalorder %s25, 0
      %p78 = por %p76, %p77
      %s80 = sadd.s32 %s79, 1
      %p83 = scmp.eq.s32.totalorder %s19, 2
      %p84 = scmp.ne.s32.totalorder %s79, %s81
      %p85 = scmp.eq.s32.totalorder %s19, 0
      %p86 = por %p84, %p85
      %p87 = scmp.ne.s32.totalorder %s79, %s81
      %p88 = scmp.eq.s32.totalorder %s24, 2
      %p89 = por %p87, %p88
      %p90 = scmp.ne.s32.totalorder %s81, %s82
      %p91 = scmp.eq.s32.totalorder %s24, 0
      %p92 = por %p90, %p91
      %p93 = scmp.ne.s32.totalorder %s81, %s82
      %p94 = scmp.eq.s32.totalorder %s25, 2
      %p95 = por %p93, %p94
      %p97 = scmp.ne.s32.totalorder %s82, %s96
      %p98 = scmp.eq.s32.totalorder %s25, 0
      %p99 = por %p97, %p98
      %s101 = sadd.s32 %s100, 1
      %p104 = scmp.eq.s32.totalorder %s19, 2
      %p105 = scmp.ne.s32.totalorder %s100, %s102
      %p106 = scmp.eq.s32.totalorder %s19, 0
      %p107 = por %p105, %p106
      %p108 = scmp.ne.s32.totalorder %s100, %s102
      %p109 = scmp.eq.s32.totalorder %s24, 2
      %p110 = por %p108, %p109
      %p111 = scmp.ne.s32.totalorder %s102, %s103
      %p112 = scmp.eq.s32.totalorder %s24, 0
      %p113 = por %p111, %p112
      %p114 = scmp.ne.s32.totalorder %s102, %s103
      %p115 = scmp.eq.s32.totalorder %s25, 2
      %p116 = por %p114, %p115
      %p118 = scmp.ne.s32.totalorder %s103, %s117
      %p119 = scmp.eq.s32.totalorder %s25, 0
      %p120 = por %p118, %p119
      %s122 = sadd.s32 %s121, 1
      %p125 = scmp.eq.s32.totalorder %s19, 2
      %p126 = scmp.ne.s32.totalorder %s121, %s123
      %p127 = scmp.eq.s32.totalorder %s19, 0
      %p128 = por %p126, %p127
      %p129 = scmp.ne.s32.totalorder %s121, %s123
      %p130 = scmp.eq.s32.totalorder %s24, 2
      %p131 = por %p129, %p130
      %p132 = scmp.ne.s32.totalorder %s123, %s124
      %p133 = scmp.eq.s32.totalorder %s24, 0
      %p134 = por %p132, %p133
      %p135 = scmp.ne.s32.totalorder %s123, %s124
      %p136 = scmp.eq.s32.totalorder %s25, 2
      %p137 = por %p135, %p136
      %p139 = scmp.ne.s32.totalorder %s124, %s138
      %p140 = scmp.eq.s32.totalorder %s25, 0
      %p141 = por %p139, %p140
      %s143 = sadd.s32 %s142, 1
      %p146 = scmp.eq.s32.totalorder %s19, 2
      %p147 = scmp.ne.s32.totalorder %s142, %s144
      %p148 = scmp.eq.s32.totalorder %s19, 0
      %p149 = por %p147, %p148
      %p150 = scmp.ne.s32.totalorder %s142, %s144
      %p151 = scmp.eq.s32.totalorder %s24, 2
      %p152 = por %p150, %p151
      %p153 = scmp.ne.s32.totalorder %s144, %s145
      %p154 = scmp.eq.s32.totalorder %s24, 0
      %p155 = por %p153, %p154
      %p156 = scmp.ne.s32.totalorder %s144, %s145
      %p157 = scmp.eq.s32.totalorder %s25, 2
      %p158 = por %p156, %p157
      %p160 = scmp.ne.s32.totalorder %s145, %s159
      %p161 = scmp.eq.s32.totalorder %s25, 0
      %p162 = por %p160, %p161
      %s164 = sadd.s32 %s163, 1
      %p167 = scmp.eq.s32.totalorder %s19, 2
      %p168 = scmp.ne.s32.totalorder %s163, %s165
      %p169 = scmp.eq.s32.totalorder %s19, 0
      %p170 = por %p168, %p169
      %p171 = scmp.ne.s32.totalorder %s163, %s165
      %p172 = scmp.eq.s32.totalorder %s24, 2
      %p173 = por %p171, %p172
      %p174 = scmp.ne.s32.totalorder %s165, %s166
      %p175 = scmp.eq.s32.totalorder %s24, 0
      %p176 = por %p174, %p175
      %p177 = scmp.ne.s32.totalorder %s165, %s166
      %p178 = scmp.eq.s32.totalorder %s25, 2
      %p179 = por %p177, %p178
      %p181 = scmp.ne.s32.totalorder %s166, %s180
      %p182 = scmp.eq.s32.totalorder %s25, 0
      %p183 = por %p181, %p182
      %s185 = sadd.s32 %s184, 1
      %p188 = scmp.eq.s32.totalorder %s19, 2
      %p189 = scmp.ne.s32.totalorder %s184, %s186
      %p190 = scmp.eq.s32.totalorder %s19, 0
      %p191 = por %p189, %p190
      %p192 = scmp.ne.s32.totalorder %s184, %s186
      %p193 = scmp.eq.s32.totalorder %s24, 2
      %p194 = por %p192, %p193
      %p195 = scmp.ne.s32.totalorder %s186, %s187
      %p196 = scmp.eq.s32.totalorder %s24, 0
      %p197 = por %p195, %p196
      %p198 = scmp.ne.s32.totalorder %s186, %s187
      %p199 = scmp.eq.s32.totalorder %s25, 2
      %p200 = por %p198, %p199
      %p202 = scmp.ne.s32.totalorder %s187, %s201
      %p203 = scmp.eq.s32.totalorder %s25, 0
      %p204 = por %p202, %p203
      %p205 = scmp.le.s32.totalorder 1, %s19
      %p206 = scmp.lt.s32.totalorder %s19, 4
      %p207 = pnand %p205, %p206
      %p208 = pneg %p207
      // Predicated region
      $region9: #{_lambda_.1} parent=5 // pred_check
        _
      $region10: #{_lambda_.1} parent=5 // pred_check_branch
        %210 = sbr.rel (%p207) target = $region12
      $region11: #{_lambda_.1} parent=5 // pred_region
        %s211 = ssub.s32 %s19, 1
        // Predicated region
        $region13: #{_lambda_.1} parent=11 // pred_check
          %p212 = pneg %p92
        $region14: #{_lambda_.1} parent=11 // pred_check_branch
          %214 = sbr.rel (%p212) target = $region16
        $region15: #{_lambda_.1} parent=11 // pred_region
          %216 = vsyncadd [#allocation7], 0
          %s218 = sshll.u32 %s2, 4
          %s219 = int_to_ptr.hbm [resolvable:$true] %s218
          %s220 = sshll.u32 [#allocation6], 4
          %s221 = int_to_ptr.vmem [resolvable:$true] %s220
          %223 = dma.hbm_to_vmem [thread:$0]  %s219, 128, %s221, [#allocation7]
        $region16: #{_lambda_.1} parent=11 // pred_fallthru
          _
        // Predicated region
        $region17: #{_lambda_.1} parent=11 // pred_check
          %p224 = pneg %p113
        $region18: #{_lambda_.1} parent=11 // pred_check_branch
          %226 = sbr.rel (%p224) target = $region20
        $region19: #{_lambda_.1} parent=11 // pred_region
          %228 = vsyncadd [#allocation7], 0
          %s229 = sshll.u32 %s3, 4
          %s230 = int_to_ptr.hbm [resolvable:$true] %s229
          %s231 = sshll.u32 [#allocation8], 4
          %s232 = int_to_ptr.vmem [resolvable:$true] %s231
          %237 = dma.hbm_to_vmem [thread:$0]  %s230, 16384, %s232, [#allocation7], 128, 128, 8
        $region20: #{_lambda_.1} parent=11 // pred_fallthru
          _
        // Predicated region
        $region21: #{_lambda_.1} parent=11 // pred_check
          %p238 = pneg %p134
        $region22: #{_lambda_.1} parent=11 // pred_check_branch
          %240 = sbr.rel (%p238) target = $region24
        $region23: #{_lambda_.1} parent=11 // pred_region
          %242 = vsyncadd [#allocation10], 0
          %s244 = sshll.u32 %s4, 4
          %s245 = int_to_ptr.hbm [resolvable:$true] %s244
          %s246 = sshll.u32 [#allocation9], 4
          %s247 = int_to_ptr.vmem [resolvable:$true] %s246
          %249 = dma.hbm_to_vmem [thread:$0]  %s245, 16, %s247, [#allocation10]
        $region24: #{_lambda_.1} parent=11 // pred_fallthru
          _
        // Predicated region
        $region25: #{_lambda_.1} parent=11 // pred_check
          %p250 = pneg %p155
        $region26: #{_lambda_.1} parent=11 // pred_check_branch
          %252 = sbr.rel (%p250) target = $region28
        $region27: #{_lambda_.1} parent=11 // pred_region
          %254 = vsyncadd [#allocation10], 0
          %s255 = sshll.u32 %s5, 4
          %s256 = int_to_ptr.hbm [resolvable:$true] %s255
          %s257 = sshll.u32 [#allocation11], 4
          %s258 = int_to_ptr.vmem [resolvable:$true] %s257
          %263 = dma.hbm_to_vmem [thread:$0]  %s256, 2048, %s258, [#allocation10], 128, 128, 8
        $region28: #{_lambda_.1} parent=11 // pred_fallthru
          _
        // Predicated region
        $region29: #{_lambda_.1} parent=11 // pred_check
          %p264 = pneg %p176
        $region30: #{_lambda_.1} parent=11 // pred_check_branch
          %266 = sbr.rel (%p264) target = $region32
        $region31: #{_lambda_.1} parent=11 // pred_region
          %268 = vsyncadd [#allocation13], 0
          %s270 = sshll.u32 %s6, 4
          %s271 = int_to_ptr.hbm [resolvable:$true] %s270
          %s272 = sshll.u32 [#allocation12], 4
          %s273 = int_to_ptr.vmem [resolvable:$true] %s272
          %275 = dma.hbm_to_vmem [thread:$0]  %s271, 16, %s273, [#allocation13]
        $region32: #{_lambda_.1} parent=11 // pred_fallthru
          _
      $region12: #{_lambda_.1} parent=5 // pred_fallthru
        _
      %p276 = scmp.lt.s32.totalorder %s19, 3
      // Predicated region
      $region33: #{_lambda_.1} parent=5 // pred_check
        %p277 = pneg %p276
      $region34: #{_lambda_.1} parent=5 // pred_check_branch
        %279 = sbr.rel (%p277) target = $region36
      $region35: #{_lambda_.1} parent=5 // pred_region
        // Predicated region
        $region37: #{_lambda_.1} parent=35 // pred_check
          %p280 = pneg %p39
        $region38: #{_lambda_.1} parent=35 // pred_check_branch
          %282 = sbr.rel (%p280) target = $region40
        $region39: #{_lambda_.1} parent=35 // pred_region
          %s283 = sand.u32 %s29, 1
          %s284 = sand.u32 %s29, 1
          %s285 = smul.addr %s284, 16
          %s286 = scalar_lea.vmem [#allocation3], %s285
          %s287 = smul.u32 2, %s19
          %s288 = smul.addr %s287, 4
          %s289 = scalar_lea.vmem %s0, %s288
          // Predicated region
          $region41: #{_lambda_.1} parent=39 // pred_check
            _
          $region42: #{_lambda_.1} parent=39 // pred_check_branch
            %291 = sbr.rel (0) target = $region44
          $region43: #{_lambda_.1} parent=39 // pred_region
            // Predicated region
            $region45: #{_lambda_.1} parent=43 // pred_check
              _
            $region46: #{_lambda_.1} parent=43 // pred_check_branch
              %293 = sbr.rel (0) target = $region48
            $region47: #{_lambda_.1} parent=43 // pred_region
              // Predicated region
              $region60: #{_lambda_.1} parent=47 // pred_check
                _
              $region61: #{_lambda_.1} parent=47 // pred_check_branch
                %311 = sbr.rel (0) target = $region63
              $region62: #{_lambda_.1} parent=47 // pred_region
                loop: start=0, step=1, limit=1
                $region64: #{_lambda_.1} parent=62 // loop_pre_header
                  _
                $region65: #{_lambda_.1} parent=62 // loop_header
                  %s313 = sphi 0, %s317
                  %p314 = scmp.ge.s32.totalorder %s313, 1
                  %s318 = sphi %s289, %s289
                  %s319 = sphi %s286, %s286
                $region66: #{_lambda_.1} parent=62 // loop_header_branch
                  %316 = sbr.rel (%p314) target = $region70
                $region67: #{_lambda_.1} parent=62 // loop_body
                  %v320 = vld [vmem:[%s318] sm:$0xff]
                  %321 = vst [vmem:[%s319] sm:$0xff] %v320
                  %v322 = vld [vmem:[%s318 + $0x18] sm:$0xff]
                  %323 = vst [vmem:[%s319 + $0x8] sm:$0xff] %v322
                $region68: #{_lambda_.1} parent=62 // loop_footer
                  %s317 = sadd.s32 1, %s313
                $region69: #{_lambda_.1} parent=62 // loop_footer_branch
                  %312 = sbr.rel target = $region65
                $region70: #{_lambda_.1} parent=62 // loop_exit
                  _
              $region63: #{_lambda_.1} parent=47 // pred_fallthru
                _
              // Predicated region
              $region71: #{_lambda_.1} parent=47 // pred_check
                _
              $region72: #{_lambda_.1} parent=47 // pred_check_branch
                %325 = sbr.rel target = $region74
              $region73: #{_lambda_.1} parent=47 // pred_region
                _
              $region74: #{_lambda_.1} parent=47 // pred_fallthru
                _
            $region48: #{_lambda_.1} parent=43 // pred_fallthru
              _
            // Predicated region
            $region49: #{_lambda_.1} parent=43 // pred_check
              _
            $region50: #{_lambda_.1} parent=43 // pred_check_branch
              %295 = sbr.rel target = $region52
            $region51: #{_lambda_.1} parent=43 // pred_region
              %s297 = ssub.s32 256, 1
              loop: start=0, step=1, limit=1
              $region53: #{_lambda_.1} parent=51 // loop_pre_header
                _
              $region54: #{_lambda_.1} parent=51 // loop_header
                %s299 = sphi 0, %s303
                %p300 = scmp.ge.s32.totalorder %s299, 1
                %s304 = sphi %s289, %s289
                %s305 = sphi %s286, %s286
              $region55: #{_lambda_.1} parent=51 // loop_header_branch
                %302 = sbr.rel (%p300) target = $region59
              $region56: #{_lambda_.1} parent=51 // loop_body
                %v306 = vld [vmem:[%s304] sm:%s297]
                %307 = vst [vmem:[%s305] sm:%s297] %v306
                %v308 = vld [vmem:[%s304 + $0x18] sm:%s297]
                %309 = vst [vmem:[%s305 + $0x8] sm:%s297] %v308
              $region57: #{_lambda_.1} parent=51 // loop_footer
                %s303 = sadd.s32 1, %s299
              $region58: #{_lambda_.1} parent=51 // loop_footer_branch
                %298 = sbr.rel target = $region54
              $region59: #{_lambda_.1} parent=51 // loop_exit
                _
            $region52: #{_lambda_.1} parent=43 // pred_fallthru
              _
          $region44: #{_lambda_.1} parent=39 // pred_fallthru
            _
          %326 = vnop
        $region40: #{_lambda_.1} parent=35 // pred_fallthru
          _
        // Predicated region
        $region75: #{_lambda_.1} parent=35 // pred_check
          %p327 = pneg %p65
        $region76: #{_lambda_.1} parent=35 // pred_check_branch
          %329 = sbr.rel (%p327) target = $region78
        $region77: #{_lambda_.1} parent=35 // pred_region
          %s330 = sand.u32 %s55, 1
          %s331 = scalar_lea.sflag [#allocation5], %s330
          %s332 = sand.u32 %s55, 1
          %s333 = smul.addr %s332, 1024
          %s334 = scalar_lea.vmem [#allocation4], %s333
          %s335 = smul.u32 32, %s19
          %337 = vsyncadd %s331, 0
          %s338 = smul.addr %s335, 8
          %s339 = smul.addr %s338, 4
          %s340 = scalar_lea.hbm %s1, %s339
          %s341 = sshll.u32 %s340, 4
          %s342 = int_to_ptr.hbm [resolvable:$true] %s341
          %s343 = sshll.u32 %s334, 4
          %s344 = int_to_ptr.vmem [resolvable:$true] %s343
          %349 = dma.hbm_to_vmem [thread:$0]  %s342, 16384, %s344, %s331, 512, 512, 32
        $region78: #{_lambda_.1} parent=35 // pred_fallthru
          _
      $region36: #{_lambda_.1} parent=5 // pred_fallthru
        _
      %p350 = scmp.le.s32.totalorder 1, %s19
      %p351 = scmp.lt.s32.totalorder %s19, 4
      %p352 = pnand %p350, %p351
      %p353 = pneg %p352
      // Predicated region
      $region79: #{_lambda_.1} parent=5 // pred_check
        _
      $region80: #{_lambda_.1} parent=5 // pred_check_branch
        %355 = sbr.rel (%p352) target = $region82
      $region81: #{_lambda_.1} parent=5 // pred_region
        %s356 = ssub.s32 %s19, 1
        %s357 = sand.u32 %s32, 1
        %s358 = sand.u32 %s32, 1
        %s359 = smul.addr %s358, 16
        %s360 = scalar_lea.vmem [#allocation3], %s359
        // Predicated region
        $region83: #{_lambda_.1} parent=81 // pred_check
          %p361 = pneg %p45
        $region84: #{_lambda_.1} parent=81 // pred_check_branch
          %363 = sbr.rel (%p361) target = $region86
        $region85: #{_lambda_.1} parent=81 // pred_region
          _
        $region86: #{_lambda_.1} parent=81 // pred_fallthru
          _
        %s364 = sand.u32 %s58, 1
        %s365 = scalar_lea.sflag [#allocation5], %s364
        %s366 = sand.u32 %s58, 1
        %s367 = smul.addr %s366, 1024
        %s368 = scalar_lea.vmem [#allocation4], %s367
        // Predicated region
        $region87: #{_lambda_.1} parent=81 // pred_check
          %p369 = pneg %p71
        $region88: #{_lambda_.1} parent=81 // pred_check_branch
          %371 = sbr.rel (%p369) target = $region90
        $region89: #{_lambda_.1} parent=81 // pred_region
          %373 = dma.done %s365, 16384
        $region90: #{_lambda_.1} parent=81 // pred_fallthru
          _
        // Predicated region
        $region91: #{_lambda_.1} parent=81 // pred_check
          %p374 = pneg %p92
        $region92: #{_lambda_.1} parent=81 // pred_check_branch
          %376 = sbr.rel (%p374) target = $region94
        $region93: #{_lambda_.1} parent=81 // pred_region
          %378 = dma.done [#allocation7], 128
        $region94: #{_lambda_.1} parent=81 // pred_fallthru
          _
        // Predicated region
        $region95: #{_lambda_.1} parent=81 // pred_check
          %p379 = pneg %p113
        $region96: #{_lambda_.1} parent=81 // pred_check_branch
          %381 = sbr.rel (%p379) target = $region98
        $region97: #{_lambda_.1} parent=81 // pred_region
          %383 = dma.done [#allocation7], 16384
        $region98: #{_lambda_.1} parent=81 // pred_fallthru
          _
        // Predicated region
        $region99: #{_lambda_.1} parent=81 // pred_check
          %p384 = pneg %p134
        $region100: #{_lambda_.1} parent=81 // pred_check_branch
          %386 = sbr.rel (%p384) target = $region102
        $region101: #{_lambda_.1} parent=81 // pred_region
          %388 = dma.done [#allocation10], 16
        $region102: #{_lambda_.1} parent=81 // pred_fallthru
          _
        // Predicated region
        $region103: #{_lambda_.1} parent=81 // pred_check
          %p389 = pneg %p155
        $region104: #{_lambda_.1} parent=81 // pred_check_branch
          %391 = sbr.rel (%p389) target = $region106
        $region105: #{_lambda_.1} parent=81 // pred_region
          %393 = dma.done [#allocation10], 2048
        $region106: #{_lambda_.1} parent=81 // pred_fallthru
          _
        // Predicated region
        $region107: #{_lambda_.1} parent=81 // pred_check
          %p394 = pneg %p176
        $region108: #{_lambda_.1} parent=81 // pred_check_branch
          %396 = sbr.rel (%p394) target = $region110
        $region109: #{_lambda_.1} parent=81 // pred_region
          %398 = dma.done [#allocation13], 16
        $region110: #{_lambda_.1} parent=81 // pred_fallthru
          _
        %s399 = sand.u32 %s32, 1
        %s400 = sand.u32 %s32, 1
        %s401 = smul.addr %s400, 16
        %s402 = scalar_lea.vmem [#allocation3], %s401
        %p403 = pneg %p45
        %p404 = pneg %p42
        %s405 = sand.u32 %s58, 1
        %s406 = scalar_lea.sflag [#allocation5], %s405
        %s407 = sand.u32 %s58, 1
        %s408 = smul.addr %s407, 1024
        %s409 = scalar_lea.vmem [#allocation4], %s408
        %p410 = pneg %p71
        %p411 = pneg %p68
        %p412 = pneg %p92
        %p413 = pneg %p89
        %p414 = pneg %p113
        %p415 = pneg %p110
        %p416 = pneg %p134
        %p417 = pneg %p131
        %p418 = pneg %p155
        %p419 = pneg %p152
        %p420 = pneg %p176
        %p421 = pneg %p173
        %p422 = pneg %p197
        %p423 = pneg %p194
        %s424 = smul.u32 2, %s24
        %s425 = smul.u32 32, %s24
        %p426 = scmp.eq.s32.totalorder %s24, 0
        // Predicated region
        $region111: #{_lambda_.1} parent=81 // pred_check
          %p427 = pneg %p426
        $region112: #{_lambda_.1} parent=81 // pred_check_branch
          %429 = sbr.rel (%p427) target = $region114
        $region113: #{_lambda_.1} parent=81 // pred_region
          %430 = vst [vmem:[#allocation2] sm:$0xff] 0.0
          %431 = vst [vmem:[#allocation2 + $0x8] sm:$0xff] 0.0
          %432 = vst [vmem:[#allocation2 + $0x10] sm:$0xff] 0.0
          %433 = vst [vmem:[#allocation2 + $0x18] sm:$0xff] 0.0
          %434 = vst [vmem:[#allocation2 + $0x20] sm:$0xff] 0.0
          %435 = vst [vmem:[#allocation2 + $0x28] sm:$0xff] 0.0
          %436 = vst [vmem:[#allocation2 + $0x30] sm:$0xff] 0.0
          %437 = vst [vmem:[#allocation2 + $0x38] sm:$0xff] 0.0
          %438 = vst [vmem:[#allocation2 + $0x40] sm:$0xff] 0.0
          %439 = vst [vmem:[#allocation2 + $0x48] sm:$0xff] 0.0
          %440 = vst [vmem:[#allocation2 + $0x50] sm:$0xff] 0.0
          %441 = vst [vmem:[#allocation2 + $0x58] sm:$0xff] 0.0
          %442 = vst [vmem:[#allocation2 + $0x60] sm:$0xff] 0.0
          %443 = vst [vmem:[#allocation2 + $0x68] sm:$0xff] 0.0
          %444 = vst [vmem:[#allocation2 + $0x70] sm:$0xff] 0.0
          %445 = vst [vmem:[#allocation2 + $0x78] sm:$0xff] 0.0
        $region114: #{_lambda_.1} parent=81 // pred_fallthru
          _
        %v446 = vld [vmem:[#allocation2] sm:$0xff]
        %v447 = vld [vmem:[#allocation2 + $0x8] sm:$0xff]
        %v448 = vld [vmem:[#allocation2 + $0x10] sm:$0xff]
        %v449 = vld [vmem:[#allocation2 + $0x18] sm:$0xff]
        %v450 = vld [vmem:[#allocation2 + $0x20] sm:$0xff]
        %v451 = vld [vmem:[#allocation2 + $0x28] sm:$0xff]
        %v452 = vld [vmem:[#allocation2 + $0x30] sm:$0xff]
        %v453 = vld [vmem:[#allocation2 + $0x38] sm:$0xff]
        %v454 = vld [vmem:[#allocation2 + $0x40] sm:$0xff]
        %v455 = vld [vmem:[#allocation2 + $0x48] sm:$0xff]
        %v456 = vld [vmem:[#allocation2 + $0x50] sm:$0xff]
        %v457 = vld [vmem:[#allocation2 + $0x58] sm:$0xff]
        %v458 = vld [vmem:[#allocation2 + $0x60] sm:$0xff]
        %v459 = vld [vmem:[#allocation2 + $0x68] sm:$0xff]
        %v460 = vld [vmem:[#allocation2 + $0x70] sm:$0xff]
        %v461 = vld [vmem:[#allocation2 + $0x78] sm:$0xff]
        %v462 = vld [vmem:[%s360] sm:$0xff]
        %v463 = vld [vmem:[%s360 + $0x8] sm:$0xff]
        %v464 = vld [vmem:[%s368] sm:$0xff]
        %v465 = vld [vmem:[%s368 + $0x8] sm:$0xff]
        %v466 = vld [vmem:[%s368 + $0x10] sm:$0xff]
        %v467 = vld [vmem:[%s368 + $0x18] sm:$0xff]
        %v468 = vld [vmem:[%s368 + $0x20] sm:$0xff]
        %v469 = vld [vmem:[%s368 + $0x28] sm:$0xff]
        %v470 = vld [vmem:[%s368 + $0x30] sm:$0xff]
        %v471 = vld [vmem:[%s368 + $0x38] sm:$0xff]
        %v472 = vld [vmem:[%s368 + $0x40] sm:$0xff]
        %v473 = vld [vmem:[%s368 + $0x48] sm:$0xff]
        %v474 = vld [vmem:[%s368 + $0x50] sm:$0xff]
        %v475 = vld [vmem:[%s368 + $0x58] sm:$0xff]
        %v476 = vld [vmem:[%s368 + $0x60] sm:$0xff]
        %v477 = vld [vmem:[%s368 + $0x68] sm:$0xff]
        %v478 = vld [vmem:[%s368 + $0x70] sm:$0xff]
        %v479 = vld [vmem:[%s368 + $0x78] sm:$0xff]
        %v480 = vld [vmem:[%s368 + $0x80] sm:$0xff]
        %v481 = vld [vmem:[%s368 + $0x88] sm:$0xff]
        %v482 = vld [vmem:[%s368 + $0x90] sm:$0xff]
        %v483 = vld [vmem:[%s368 + $0x98] sm:$0xff]
        %v484 = vld [vmem:[%s368 + $0xa0] sm:$0xff]
        %v485 = vld [vmem:[%s368 + $0xa8] sm:$0xff]
        %v486 = vld [vmem:[%s368 + $0xb0] sm:$0xff]
        %v487 = vld [vmem:[%s368 + $0xb8] sm:$0xff]
        %v488 = vld [vmem:[%s368 + $0xc0] sm:$0xff]
        %v489 = vld [vmem:[%s368 + $0xc8] sm:$0xff]
        %v490 = vld [vmem:[%s368 + $0xd0] sm:$0xff]
        %v491 = vld [vmem:[%s368 + $0xd8] sm:$0xff]
        %v492 = vld [vmem:[%s368 + $0xe0] sm:$0xff]
        %v493 = vld [vmem:[%s368 + $0xe8] sm:$0xff]
        %v494 = vld [vmem:[%s368 + $0xf0] sm:$0xff]
        %v495 = vld [vmem:[%s368 + $0xf8] sm:$0xff]
        %v496 = vld [vmem:[%s368 + $0x100] sm:$0xff]
        %v497 = vld [vmem:[%s368 + $0x108] sm:$0xff]
        %v498 = vld [vmem:[%s368 + $0x110] sm:$0xff]
        %v499 = vld [vmem:[%s368 + $0x118] sm:$0xff]
        %v500 = vld [vmem:[%s368 + $0x120] sm:$0xff]
        %v501 = vld [vmem:[%s368 + $0x128] sm:$0xff]
        %v502 = vld [vmem:[%s368 + $0x130] sm:$0xff]
        %v503 = vld [vmem:[%s368 + $0x138] sm:$0xff]
        %v504 = vld [vmem:[%s368 + $0x140] sm:$0xff]
        %v505 = vld [vmem:[%s368 + $0x148] sm:$0xff]
        %v506 = vld [vmem:[%s368 + $0x150] sm:$0xff]
        %v507 = vld [vmem:[%s368 + $0x158] sm:$0xff]
        %v508 = vld [vmem:[%s368 + $0x160] sm:$0xff]
        %v509 = vld [vmem:[%s368 + $0x168] sm:$0xff]
        %v510 = vld [vmem:[%s368 + $0x170] sm:$0xff]
        %v511 = vld [vmem:[%s368 + $0x178] sm:$0xff]
        %v512 = vld [vmem:[%s368 + $0x180] sm:$0xff]
        %v513 = vld [vmem:[%s368 + $0x188] sm:$0xff]
        %v514 = vld [vmem:[%s368 + $0x190] sm:$0xff]
        %v515 = vld [vmem:[%s368 + $0x198] sm:$0xff]
        %v516 = vld [vmem:[%s368 + $0x1a0] sm:$0xff]
        %v517 = vld [vmem:[%s368 + $0x1a8] sm:$0xff]
        %v518 = vld [vmem:[%s368 + $0x1b0] sm:$0xff]
        %v519 = vld [vmem:[%s368 + $0x1b8] sm:$0xff]
        %v520 = vld [vmem:[%s368 + $0x1c0] sm:$0xff]
        %v521 = vld [vmem:[%s368 + $0x1c8] sm:$0xff]
        %v522 = vld [vmem:[%s368 + $0x1d0] sm:$0xff]
        %v523 = vld [vmem:[%s368 + $0x1d8] sm:$0xff]
        %v524 = vld [vmem:[%s368 + $0x1e0] sm:$0xff]
        %v525 = vld [vmem:[%s368 + $0x1e8] sm:$0xff]
        %v526 = vld [vmem:[%s368 + $0x1f0] sm:$0xff]
        %v527 = vld [vmem:[%s368 + $0x1f8] sm:$0xff]
        %v528 = vld [vmem:[%s368 + $0x200] sm:$0xff]
        %v529 = vld [vmem:[%s368 + $0x208] sm:$0xff]
        %v530 = vld [vmem:[%s368 + $0x210] sm:$0xff]
        %v531 = vld [vmem:[%s368 + $0x218] sm:$0xff]
        %v532 = vld [vmem:[%s368 + $0x220] sm:$0xff]
        %v533 = vld [vmem:[%s368 + $0x228] sm:$0xff]
        %v534 = vld [vmem:[%s368 + $0x230] sm:$0xff]
        %v535 = vld [vmem:[%s368 + $0x238] sm:$0xff]
        %v536 = vld [vmem:[%s368 + $0x240] sm:$0xff]
        %v537 = vld [vmem:[%s368 + $0x248] sm:$0xff]
        %v538 = vld [vmem:[%s368 + $0x250] sm:$0xff]
        %v539 = vld [vmem:[%s368 + $0x258] sm:$0xff]
        %v540 = vld [vmem:[%s368 + $0x260] sm:$0xff]
        %v541 = vld [vmem:[%s368 + $0x268] sm:$0xff]
        %v542 = vld [vmem:[%s368 + $0x270] sm:$0xff]
        %v543 = vld [vmem:[%s368 + $0x278] sm:$0xff]
        %v544 = vld [vmem:[%s368 + $0x280] sm:$0xff]
        %v545 = vld [vmem:[%s368 + $0x288] sm:$0xff]
        %v546 = vld [vmem:[%s368 + $0x290] sm:$0xff]
        %v547 = vld [vmem:[%s368 + $0x298] sm:$0xff]
        %v548 = vld [vmem:[%s368 + $0x2a0] sm:$0xff]
        %v549 = vld [vmem:[%s368 + $0x2a8] sm:$0xff]
        %v550 = vld [vmem:[%s368 + $0x2b0] sm:$0xff]
        %v551 = vld [vmem:[%s368 + $0x2b8] sm:$0xff]
        %v552 = vld [vmem:[%s368 + $0x2c0] sm:$0xff]
        %v553 = vld [vmem:[%s368 + $0x2c8] sm:$0xff]
        %v554 = vld [vmem:[%s368 + $0x2d0] sm:$0xff]
        %v555 = vld [vmem:[%s368 + $0x2d8] sm:$0xff]
        %v556 = vld [vmem:[%s368 + $0x2e0] sm:$0xff]
        %v557 = vld [vmem:[%s368 + $0x2e8] sm:$0xff]
        %v558 = vld [vmem:[%s368 + $0x2f0] sm:$0xff]
        %v559 = vld [vmem:[%s368 + $0x2f8] sm:$0xff]
        %v560 = vld [vmem:[%s368 + $0x300] sm:$0xff]
        %v561 = vld [vmem:[%s368 + $0x308] sm:$0xff]
        %v562 = vld [vmem:[%s368 + $0x310] sm:$0xff]
        %v563 = vld [vmem:[%s368 + $0x318] sm:$0xff]
        %v564 = vld [vmem:[%s368 + $0x320] sm:$0xff]
        %v565 = vld [vmem:[%s368 + $0x328] sm:$0xff]
        %v566 = vld [vmem:[%s368 + $0x330] sm:$0xff]
        %v567 = vld [vmem:[%s368 + $0x338] sm:$0xff]
        %v568 = vld [vmem:[%s368 + $0x340] sm:$0xff]
        %v569 = vld [vmem:[%s368 + $0x348] sm:$0xff]
        %v570 = vld [vmem:[%s368 + $0x350] sm:$0xff]
        %v571 = vld [vmem:[%s368 + $0x358] sm:$0xff]
        %v572 = vld [vmem:[%s368 + $0x360] sm:$0xff]
        %v573 = vld [vmem:[%s368 + $0x368] sm:$0xff]
        %v574 = vld [vmem:[%s368 + $0x370] sm:$0xff]
        %v575 = vld [vmem:[%s368 + $0x378] sm:$0xff]
        %v576 = vld [vmem:[%s368 + $0x380] sm:$0xff]
        %v577 = vld [vmem:[%s368 + $0x388] sm:$0xff]
        %v578 = vld [vmem:[%s368 + $0x390] sm:$0xff]
        %v579 = vld [vmem:[%s368 + $0x398] sm:$0xff]
        %v580 = vld [vmem:[%s368 + $0x3a0] sm:$0xff]
        %v581 = vld [vmem:[%s368 + $0x3a8] sm:$0xff]
        %v582 = vld [vmem:[%s368 + $0x3b0] sm:$0xff]
        %v583 = vld [vmem:[%s368 + $0x3b8] sm:$0xff]
        %v584 = vld [vmem:[%s368 + $0x3c0] sm:$0xff]
        %v585 = vld [vmem:[%s368 + $0x3c8] sm:$0xff]
        %v586 = vld [vmem:[%s368 + $0x3d0] sm:$0xff]
        %v587 = vld [vmem:[%s368 + $0x3d8] sm:$0xff]
        %v588 = vld [vmem:[%s368 + $0x3e0] sm:$0xff]
        %v589 = vld [vmem:[%s368 + $0x3e8] sm:$0xff]
        %v590 = vld [vmem:[%s368 + $0x3f0] sm:$0xff]
        %v591 = vld [vmem:[%s368 + $0x3f8] sm:$0xff]
        %v594 = vunpack.c.l.b16 %v462
        %v595 = vunpack.c.h.b16 %v462
        %v596 = vunpack.c.l.b16 %v463
        %v597 = vunpack.c.h.b16 %v463
        %v598 = vpack.c.b16 %v596, %v594
        %v599 = vpack.c.b16 %v597, %v595
        %v730 = vunpack.c.l.b16 %v464
        %v731 = vunpack.c.h.b16 %v464
        %v732 = vunpack.c.l.b16 %v465
        %v733 = vunpack.c.h.b16 %v465
        %v734 = vunpack.c.l.b16 %v466
        %v735 = vunpack.c.h.b16 %v466
        %v736 = vunpack.c.l.b16 %v467
        %v737 = vunpack.c.h.b16 %v467
        %v738 = vunpack.c.l.b16 %v468
        %v739 = vunpack.c.h.b16 %v468
        %v740 = vunpack.c.l.b16 %v469
        %v741 = vunpack.c.h.b16 %v469
        %v742 = vunpack.c.l.b16 %v470
        %v743 = vunpack.c.h.b16 %v470
        %v744 = vunpack.c.l.b16 %v471
        %v745 = vunpack.c.h.b16 %v471
        %v746 = vunpack.c.l.b16 %v472
        %v747 = vunpack.c.h.b16 %v472
        %v748 = vunpack.c.l.b16 %v473
        %v749 = vunpack.c.h.b16 %v473
        %v750 = vunpack.c.l.b16 %v474
        %v751 = vunpack.c.h.b16 %v474
        %v752 = vunpack.c.l.b16 %v475
        %v753 = vunpack.c.h.b16 %v475
        %v754 = vunpack.c.l.b16 %v476
        %v755 = vunpack.c.h.b16 %v476
        %v756 = vunpack.c.l.b16 %v477
        %v757 = vunpack.c.h.b16 %v477
        %v758 = vunpack.c.l.b16 %v478
        %v759 = vunpack.c.h.b16 %v478
        %v760 = vunpack.c.l.b16 %v479
        %v761 = vunpack.c.h.b16 %v479
        %v762 = vunpack.c.l.b16 %v480
        %v763 = vunpack.c.h.b16 %v480
        %v764 = vunpack.c.l.b16 %v481
        %v765 = vunpack.c.h.b16 %v481
        %v766 = vunpack.c.l.b16 %v482
        %v767 = vunpack.c.h.b16 %v482
        %v768 = vunpack.c.l.b16 %v483
        %v769 = vunpack.c.h.b16 %v483
        %v770 = vunpack.c.l.b16 %v484
        %v771 = vunpack.c.h.b16 %v484
        %v772 = vunpack.c.l.b16 %v485
        %v773 = vunpack.c.h.b16 %v485
        %v774 = vunpack.c.l.b16 %v486
        %v775 = vunpack.c.h.b16 %v486
        %v776 = vunpack.c.l.b16 %v487
        %v777 = vunpack.c.h.b16 %v487
        %v778 = vunpack.c.l.b16 %v488
        %v779 = vunpack.c.h.b16 %v488
        %v780 = vunpack.c.l.b16 %v489
        %v781 = vunpack.c.h.b16 %v489
        %v782 = vunpack.c.l.b16 %v490
        %v783 = vunpack.c.h.b16 %v490
        %v784 = vunpack.c.l.b16 %v491
        %v785 = vunpack.c.h.b16 %v491
        %v786 = vunpack.c.l.b16 %v492
        %v787 = vunpack.c.h.b16 %v492
        %v788 = vunpack.c.l.b16 %v493
        %v789 = vunpack.c.h.b16 %v493
        %v790 = vunpack.c.l.b16 %v494
        %v791 = vunpack.c.h.b16 %v494
        %v792 = vunpack.c.l.b16 %v495
        %v793 = vunpack.c.h.b16 %v495
        %v794 = vunpack.c.l.b16 %v496
        %v795 = vunpack.c.h.b16 %v496
        %v796 = vunpack.c.l.b16 %v497
        %v797 = vunpack.c.h.b16 %v497
        %v798 = vunpack.c.l.b16 %v498
        %v799 = vunpack.c.h.b16 %v498
        %v800 = vunpack.c.l.b16 %v499
        %v801 = vunpack.c.h.b16 %v499
        %v802 = vunpack.c.l.b16 %v500
        %v803 = vunpack.c.h.b16 %v500
        %v804 = vunpack.c.l.b16 %v501
        %v805 = vunpack.c.h.b16 %v501
        %v806 = vunpack.c.l.b16 %v502
        %v807 = vunpack.c.h.b16 %v502
        %v808 = vunpack.c.l.b16 %v503
        %v809 = vunpack.c.h.b16 %v503
        %v810 = vunpack.c.l.b16 %v504
        %v811 = vunpack.c.h.b16 %v504
        %v812 = vunpack.c.l.b16 %v505
        %v813 = vunpack.c.h.b16 %v505
        %v814 = vunpack.c.l.b16 %v506
        %v815 = vunpack.c.h.b16 %v506
        %v816 = vunpack.c.l.b16 %v507
        %v817 = vunpack.c.h.b16 %v507
        %v818 = vunpack.c.l.b16 %v508
        %v819 = vunpack.c.h.b16 %v508
        %v820 = vunpack.c.l.b16 %v509
        %v821 = vunpack.c.h.b16 %v509
        %v822 = vunpack.c.l.b16 %v510
        %v823 = vunpack.c.h.b16 %v510
        %v824 = vunpack.c.l.b16 %v511
        %v825 = vunpack.c.h.b16 %v511
        %v826 = vunpack.c.l.b16 %v512
        %v827 = vunpack.c.h.b16 %v512
        %v828 = vunpack.c.l.b16 %v513
        %v829 = vunpack.c.h.b16 %v513
        %v830 = vunpack.c.l.b16 %v514
        %v831 = vunpack.c.h.b16 %v514
        %v832 = vunpack.c.l.b16 %v515
        %v833 = vunpack.c.h.b16 %v515
        %v834 = vunpack.c.l.b16 %v516
        %v835 = vunpack.c.h.b16 %v516
        %v836 = vunpack.c.l.b16 %v517
        %v837 = vunpack.c.h.b16 %v517
        %v838 = vunpack.c.l.b16 %v518
        %v839 = vunpack.c.h.b16 %v518
        %v840 = vunpack.c.l.b16 %v519
        %v841 = vunpack.c.h.b16 %v519
        %v842 = vunpack.c.l.b16 %v520
        %v843 = vunpack.c.h.b16 %v520
        %v844 = vunpack.c.l.b16 %v521
        %v845 = vunpack.c.h.b16 %v521
        %v846 = vunpack.c.l.b16 %v522
        %v847 = vunpack.c.h.b16 %v522
        %v848 = vunpack.c.l.b16 %v523
        %v849 = vunpack.c.h.b16 %v523
        %v850 = vunpack.c.l.b16 %v524
        %v851 = vunpack.c.h.b16 %v524
        %v852 = vunpack.c.l.b16 %v525
        %v853 = vunpack.c.h.b16 %v525
        %v854 = vunpack.c.l.b16 %v526
        %v855 = vunpack.c.h.b16 %v526
        %v856 = vunpack.c.l.b16 %v527
        %v857 = vunpack.c.h.b16 %v527
        %v858 = vunpack.c.l.b16 %v528
        %v859 = vunpack.c.h.b16 %v528
        %v860 = vunpack.c.l.b16 %v529
        %v861 = vunpack.c.h.b16 %v529
        %v862 = vunpack.c.l.b16 %v530
        %v863 = vunpack.c.h.b16 %v530
        %v864 = vunpack.c.l.b16 %v531
        %v865 = vunpack.c.h.b16 %v531
        %v866 = vunpack.c.l.b16 %v532
        %v867 = vunpack.c.h.b16 %v532
        %v868 = vunpack.c.l.b16 %v533
        %v869 = vunpack.c.h.b16 %v533
        %v870 = vunpack.c.l.b16 %v534
        %v871 = vunpack.c.h.b16 %v534
        %v872 = vunpack.c.l.b16 %v535
        %v873 = vunpack.c.h.b16 %v535
        %v874 = vunpack.c.l.b16 %v536
        %v875 = vunpack.c.h.b16 %v536
        %v876 = vunpack.c.l.b16 %v537
        %v877 = vunpack.c.h.b16 %v537
        %v878 = vunpack.c.l.b16 %v538
        %v879 = vunpack.c.h.b16 %v538
        %v880 = vunpack.c.l.b16 %v539
        %v881 = vunpack.c.h.b16 %v539
        %v882 = vunpack.c.l.b16 %v540
        %v883 = vunpack.c.h.b16 %v540
        %v884 = vunpack.c.l.b16 %v541
        %v885 = vunpack.c.h.b16 %v541
        %v886 = vunpack.c.l.b16 %v542
        %v887 = vunpack.c.h.b16 %v542
        %v888 = vunpack.c.l.b16 %v543
        %v889 = vunpack.c.h.b16 %v543
        %v890 = vunpack.c.l.b16 %v544
        %v891 = vunpack.c.h.b16 %v544
        %v892 = vunpack.c.l.b16 %v545
        %v893 = vunpack.c.h.b16 %v545
        %v894 = vunpack.c.l.b16 %v546
        %v895 = vunpack.c.h.b16 %v546
        %v896 = vunpack.c.l.b16 %v547
        %v897 = vunpack.c.h.b16 %v547
        %v898 = vunpack.c.l.b16 %v548
        %v899 = vunpack.c.h.b16 %v548
        %v900 = vunpack.c.l.b16 %v549
        %v901 = vunpack.c.h.b16 %v549
        %v902 = vunpack.c.l.b16 %v550
        %v903 = vunpack.c.h.b16 %v550
        %v904 = vunpack.c.l.b16 %v551
        %v905 = vunpack.c.h.b16 %v551
        %v906 = vunpack.c.l.b16 %v552
        %v907 = vunpack.c.h.b16 %v552
        %v908 = vunpack.c.l.b16 %v553
        %v909 = vunpack.c.h.b16 %v553
        %v910 = vunpack.c.l.b16 %v554
        %v911 = vunpack.c.h.b16 %v554
        %v912 = vunpack.c.l.b16 %v555
        %v913 = vunpack.c.h.b16 %v555
        %v914 = vunpack.c.l.b16 %v556
        %v915 = vunpack.c.h.b16 %v556
        %v916 = vunpack.c.l.b16 %v557
        %v917 = vunpack.c.h.b16 %v557
        %v918 = vunpack.c.l.b16 %v558
        %v919 = vunpack.c.h.b16 %v558
        %v920 = vunpack.c.l.b16 %v559
        %v921 = vunpack.c.h.b16 %v559
        %v922 = vunpack.c.l.b16 %v560
        %v923 = vunpack.c.h.b16 %v560
        %v924 = vunpack.c.l.b16 %v561
        %v925 = vunpack.c.h.b16 %v561
        %v926 = vunpack.c.l.b16 %v562
        %v927 = vunpack.c.h.b16 %v562
        %v928 = vunpack.c.l.b16 %v563
        %v929 = vunpack.c.h.b16 %v563
        %v930 = vunpack.c.l.b16 %v564
        %v931 = vunpack.c.h.b16 %v564
        %v932 = vunpack.c.l.b16 %v565
        %v933 = vunpack.c.h.b16 %v565
        %v934 = vunpack.c.l.b16 %v566
        %v935 = vunpack.c.h.b16 %v566
        %v936 = vunpack.c.l.b16 %v567
        %v937 = vunpack.c.h.b16 %v567
        %v938 = vunpack.c.l.b16 %v568
        %v939 = vunpack.c.h.b16 %v568
        %v940 = vunpack.c.l.b16 %v569
        %v941 = vunpack.c.h.b16 %v569
        %v942 = vunpack.c.l.b16 %v570
        %v943 = vunpack.c.h.b16 %v570
        %v944 = vunpack.c.l.b16 %v571
        %v945 = vunpack.c.h.b16 %v571
        %v946 = vunpack.c.l.b16 %v572
        %v947 = vunpack.c.h.b16 %v572
        %v948 = vunpack.c.l.b16 %v573
        %v949 = vunpack.c.h.b16 %v573
        %v950 = vunpack.c.l.b16 %v574
        %v951 = vunpack.c.h.b16 %v574
        %v952 = vunpack.c.l.b16 %v575
        %v953 = vunpack.c.h.b16 %v575
        %v954 = vunpack.c.l.b16 %v576
        %v955 = vunpack.c.h.b16 %v576
        %v956 = vunpack.c.l.b16 %v577
        %v957 = vunpack.c.h.b16 %v577
        %v958 = vunpack.c.l.b16 %v578
        %v959 = vunpack.c.h.b16 %v578
        %v960 = vunpack.c.l.b16 %v579
        %v961 = vunpack.c.h.b16 %v579
        %v962 = vunpack.c.l.b16 %v580
        %v963 = vunpack.c.h.b16 %v580
        %v964 = vunpack.c.l.b16 %v581
        %v965 = vunpack.c.h.b16 %v581
        %v966 = vunpack.c.l.b16 %v582
        %v967 = vunpack.c.h.b16 %v582
        %v968 = vunpack.c.l.b16 %v583
        %v969 = vunpack.c.h.b16 %v583
        %v970 = vunpack.c.l.b16 %v584
        %v971 = vunpack.c.h.b16 %v584
        %v972 = vunpack.c.l.b16 %v585
        %v973 = vunpack.c.h.b16 %v585
        %v974 = vunpack.c.l.b16 %v586
        %v975 = vunpack.c.h.b16 %v586
        %v976 = vunpack.c.l.b16 %v587
        %v977 = vunpack.c.h.b16 %v587
        %v978 = vunpack.c.l.b16 %v588
        %v979 = vunpack.c.h.b16 %v588
        %v980 = vunpack.c.l.b16 %v589
        %v981 = vunpack.c.h.b16 %v589
        %v982 = vunpack.c.l.b16 %v590
        %v983 = vunpack.c.h.b16 %v590
        %v984 = vunpack.c.l.b16 %v591
        %v985 = vunpack.c.h.b16 %v591
        %v986 = vpack.c.b16 %v738, %v730
        %v987 = vpack.c.b16 %v739, %v731
        %v988 = vpack.c.b16 %v740, %v732
        %v989 = vpack.c.b16 %v741, %v733
        %v990 = vpack.c.b16 %v742, %v734
        %v991 = vpack.c.b16 %v743, %v735
        %v992 = vpack.c.b16 %v744, %v736
        %v993 = vpack.c.b16 %v745, %v737
        %v994 = vpack.c.b16 %v754, %v746
        %v995 = vpack.c.b16 %v755, %v747
        %v996 = vpack.c.b16 %v756, %v748
        %v997 = vpack.c.b16 %v757, %v749
        %v998 = vpack.c.b16 %v758, %v750
        %v999 = vpack.c.b16 %v759, %v751
        %v1000 = vpack.c.b16 %v760, %v752
        %v1001 = vpack.c.b16 %v761, %v753
        %v1002 = vpack.c.b16 %v770, %v762
        %v1003 = vpack.c.b16 %v771, %v763
        %v1004 = vpack.c.b16 %v772, %v764
        %v1005 = vpack.c.b16 %v773, %v765
        %v1006 = vpack.c.b16 %v774, %v766
        %v1007 = vpack.c.b16 %v775, %v767
        %v1008 = vpack.c.b16 %v776, %v768
        %v1009 = vpack.c.b16 %v777, %v769
        %v1010 = vpack.c.b16 %v786, %v778
        %v1011 = vpack.c.b16 %v787, %v779
        %v1012 = vpack.c.b16 %v788, %v780
        %v1013 = vpack.c.b16 %v789, %v781
        %v1014 = vpack.c.b16 %v790, %v782
        %v1015 = vpack.c.b16 %v791, %v783
        %v1016 = vpack.c.b16 %v792, %v784
        %v1017 = vpack.c.b16 %v793, %v785
        %v1018 = vpack.c.b16 %v802, %v794
        %v1019 = vpack.c.b16 %v803, %v795
        %v1020 = vpack.c.b16 %v804, %v796
        %v1021 = vpack.c.b16 %v805, %v797
        %v1022 = vpack.c.b16 %v806, %v798
        %v1023 = vpack.c.b16 %v807, %v799
        %v1024 = vpack.c.b16 %v808, %v800
        %v1025 = vpack.c.b16 %v809, %v801
        %v1026 = vpack.c.b16 %v818, %v810
        %v1027 = vpack.c.b16 %v819, %v811
        %v1028 = vpack.c.b16 %v820, %v812
        %v1029 = vpack.c.b16 %v821, %v813
        %v1030 = vpack.c.b16 %v822, %v814
        %v1031 = vpack.c.b16 %v823, %v815
        %v1032 = vpack.c.b16 %v824, %v816
        %v1033 = vpack.c.b16 %v825, %v817
        %v1034 = vpack.c.b16 %v834, %v826
        %v1035 = vpack.c.b16 %v835, %v827
        %v1036 = vpack.c.b16 %v836, %v828
        %v1037 = vpack.c.b16 %v837, %v829
        %v1038 = vpack.c.b16 %v838, %v830
        %v1039 = vpack.c.b16 %v839, %v831
        %v1040 = vpack.c.b16 %v840, %v832
        %v1041 = vpack.c.b16 %v841, %v833
        %v1042 = vpack.c.b16 %v850, %v842
        %v1043 = vpack.c.b16 %v851, %v843
        %v1044 = vpack.c.b16 %v852, %v844
        %v1045 = vpack.c.b16 %v853, %v845
        %v1046 = vpack.c.b16 %v854, %v846
        %v1047 = vpack.c.b16 %v855, %v847
        %v1048 = vpack.c.b16 %v856, %v848
        %v1049 = vpack.c.b16 %v857, %v849
        %v1050 = vpack.c.b16 %v866, %v858
        %v1051 = vpack.c.b16 %v867, %v859
        %v1052 = vpack.c.b16 %v868, %v860
        %v1053 = vpack.c.b16 %v869, %v861
        %v1054 = vpack.c.b16 %v870, %v862
        %v1055 = vpack.c.b16 %v871, %v863
        %v1056 = vpack.c.b16 %v872, %v864
        %v1057 = vpack.c.b16 %v873, %v865
        %v1058 = vpack.c.b16 %v882, %v874
        %v1059 = vpack.c.b16 %v883, %v875
        %v1060 = vpack.c.b16 %v884, %v876
        %v1061 = vpack.c.b16 %v885, %v877
        %v1062 = vpack.c.b16 %v886, %v878
        %v1063 = vpack.c.b16 %v887, %v879
        %v1064 = vpack.c.b16 %v888, %v880
        %v1065 = vpack.c.b16 %v889, %v881
        %v1066 = vpack.c.b16 %v898, %v890
        %v1067 = vpack.c.b16 %v899, %v891
        %v1068 = vpack.c.b16 %v900, %v892
        %v1069 = vpack.c.b16 %v901, %v893
        %v1070 = vpack.c.b16 %v902, %v894
        %v1071 = vpack.c.b16 %v903, %v895
        %v1072 = vpack.c.b16 %v904, %v896
        %v1073 = vpack.c.b16 %v905, %v897
        %v1074 = vpack.c.b16 %v914, %v906
        %v1075 = vpack.c.b16 %v915, %v907
        %v1076 = vpack.c.b16 %v916, %v908
        %v1077 = vpack.c.b16 %v917, %v909
        %v1078 = vpack.c.b16 %v918, %v910
        %v1079 = vpack.c.b16 %v919, %v911
        %v1080 = vpack.c.b16 %v920, %v912
        %v1081 = vpack.c.b16 %v921, %v913
        %v1082 = vpack.c.b16 %v930, %v922
        %v1083 = vpack.c.b16 %v931, %v923
        %v1084 = vpack.c.b16 %v932, %v924
        %v1085 = vpack.c.b16 %v933, %v925
        %v1086 = vpack.c.b16 %v934, %v926
        %v1087 = vpack.c.b16 %v935, %v927
        %v1088 = vpack.c.b16 %v936, %v928
        %v1089 = vpack.c.b16 %v937, %v929
        %v1090 = vpack.c.b16 %v946, %v938
        %v1091 = vpack.c.b16 %v947, %v939
        %v1092 = vpack.c.b16 %v948, %v940
        %v1093 = vpack.c.b16 %v949, %v941
        %v1094 = vpack.c.b16 %v950, %v942
        %v1095 = vpack.c.b16 %v951, %v943
        %v1096 = vpack.c.b16 %v952, %v944
        %v1097 = vpack.c.b16 %v953, %v945
        %v1098 = vpack.c.b16 %v962, %v954
        %v1099 = vpack.c.b16 %v963, %v955
        %v1100 = vpack.c.b16 %v964, %v956
        %v1101 = vpack.c.b16 %v965, %v957
        %v1102 = vpack.c.b16 %v966, %v958
        %v1103 = vpack.c.b16 %v967, %v959
        %v1104 = vpack.c.b16 %v968, %v960
        %v1105 = vpack.c.b16 %v969, %v961
        %v1106 = vpack.c.b16 %v978, %v970
        %v1107 = vpack.c.b16 %v979, %v971
        %v1108 = vpack.c.b16 %v980, %v972
        %v1109 = vpack.c.b16 %v981, %v973
        %v1110 = vpack.c.b16 %v982, %v974
        %v1111 = vpack.c.b16 %v983, %v975
        %v1112 = vpack.c.b16 %v984, %v976
        %v1113 = vpack.c.b16 %v985, %v977
        %1242 = vmatpush.bf16.msra.mxu0 %v1042
        %1243 = vmatpush.bf16.msra.mxu0 %v1034
        %1244 = vmatpush.bf16.msra.mxu0 %v1026
        %1245 = vmatpush.bf16.msra.mxu0 %v1018
        %1246 = vmatpush.bf16.msra.mxu0 %v1010
        %1247 = vmatpush.bf16.msra.mxu0 %v1002
        %1248 = vmatpush.bf16.msra.mxu0 %v994
        %1249 = vmatpush.bf16.msra.mxu0 %v986
        %1250 = vmatmul.bf16.gmra.mxu0 %v598
        %v1251 = vpop.f32.mrf.mxu0
        %v1252 = vadd.f32 0.0, %v1251
        %v1253 = vpop.f32.mrf.mxu0
        %v1254 = vadd.f32 0.0, %v1253
        %1255 = vdwg.mxu0
        %1256 = vmatpush.bf16.msra.mxu0 %v1106
        %1257 = vmatpush.bf16.msra.mxu0 %v1098
        %1258 = vmatpush.bf16.msra.mxu0 %v1090
        %1259 = vmatpush.bf16.msra.mxu0 %v1082
        %1260 = vmatpush.bf16.msra.mxu0 %v1074
        %1261 = vmatpush.bf16.msra.mxu0 %v1066
        %1262 = vmatpush.bf16.msra.mxu0 %v1058
        %1263 = vmatpush.bf16.msra.mxu0 %v1050
        %1264 = vmatmul.bf16.gmra.mxu0 %v599
        %v1265 = vpop.f32.mrf.mxu0
        %v1266 = vadd.f32 %v1252, %v1265
        %v1267 = vpop.f32.mrf.mxu0
        %v1268 = vadd.f32 %v1254, %v1267
        %1269 = vdwg.mxu0
        %1270 = vmatpush.bf16.msra.mxu0 %v1043
        %1271 = vmatpush.bf16.msra.mxu0 %v1035
        %1272 = vmatpush.bf16.msra.mxu0 %v1027
        %1273 = vmatpush.bf16.msra.mxu0 %v1019
        %1274 = vmatpush.bf16.msra.mxu0 %v1011
        %1275 = vmatpush.bf16.msra.mxu0 %v1003
        %1276 = vmatpush.bf16.msra.mxu0 %v995
        %1277 = vmatpush.bf16.msra.mxu0 %v987
        %1278 = vmatmul.bf16.gmra.mxu0 %v598
        %v1279 = vpop.f32.mrf.mxu0
        %v1280 = vadd.f32 0.0, %v1279
        %v1281 = vpop.f32.mrf.mxu0
        %v1282 = vadd.f32 0.0, %v1281
        %1283 = vdwg.mxu0
        %1284 = vmatpush.bf16.msra.mxu0 %v1107
        %1285 = vmatpush.bf16.msra.mxu0 %v1099
        %1286 = vmatpush.bf16.msra.mxu0 %v1091
        %1287 = vmatpush.bf16.msra.mxu0 %v1083
        %1288 = vmatpush.bf16.msra.mxu0 %v1075
        %1289 = vmatpush.bf16.msra.mxu0 %v1067
        %1290 = vmatpush.bf16.msra.mxu0 %v1059
        %1291 = vmatpush.bf16.msra.mxu0 %v1051
        %1292 = vmatmul.bf16.gmra.mxu0 %v599
        %v1293 = vpop.f32.mrf.mxu0
        %v1294 = vadd.f32 %v1280, %v1293
        %v1295 = vpop.f32.mrf.mxu0
        %v1296 = vadd.f32 %v1282, %v1295
        %1297 = vdwg.mxu0
        %1298 = vmatpush.bf16.msra.mxu0 %v1044
        %1299 = vmatpush.bf16.msra.mxu0 %v1036
        %1300 = vmatpush.bf16.msra.mxu0 %v1028
        %1301 = vmatpush.bf16.msra.mxu0 %v1020
        %1302 = vmatpush.bf16.msra.mxu0 %v1012
        %1303 = vmatpush.bf16.msra.mxu0 %v1004
        %1304 = vmatpush.bf16.msra.mxu0 %v996
        %1305 = vmatpush.bf16.msra.mxu0 %v988
        %1306 = vmatmul.bf16.gmra.mxu0 %v598
        %v1307 = vpop.f32.mrf.mxu0
        %v1308 = vadd.f32 0.0, %v1307
        %v1309 = vpop.f32.mrf.mxu0
        %v1310 = vadd.f32 0.0, %v1309
        %1311 = vdwg.mxu0
        %1312 = vmatpush.bf16.msra.mxu0 %v1108
        %1313 = vmatpush.bf16.msra.mxu0 %v1100
        %1314 = vmatpush.bf16.msra.mxu0 %v1092
        %1315 = vmatpush.bf16.msra.mxu0 %v1084
        %1316 = vmatpush.bf16.msra.mxu0 %v1076
        %1317 = vmatpush.bf16.msra.mxu0 %v1068
        %1318 = vmatpush.bf16.msra.mxu0 %v1060
        %1319 = vmatpush.bf16.msra.mxu0 %v1052
        %1320 = vmatmul.bf16.gmra.mxu0 %v599
        %v1321 = vpop.f32.mrf.mxu0
        %v1322 = vadd.f32 %v1308, %v1321
        %v1323 = vpop.f32.mrf.mxu0
        %v1324 = vadd.f32 %v1310, %v1323
        %1325 = vdwg.mxu0
        %1326 = vmatpush.bf16.msra.mxu0 %v1045
        %1327 = vmatpush.bf16.msra.mxu0 %v1037
        %1328 = vmatpush.bf16.msra.mxu0 %v1029
        %1329 = vmatpush.bf16.msra.mxu0 %v1021
        %1330 = vmatpush.bf16.msra.mxu0 %v1013
        %1331 = vmatpush.bf16.msra.mxu0 %v1005
        %1332 = vmatpush.bf16.msra.mxu0 %v997
        %1333 = vmatpush.bf16.msra.mxu0 %v989
        %1334 = vmatmul.bf16.gmra.mxu0 %v598
        %v1335 = vpop.f32.mrf.mxu0
        %v1336 = vadd.f32 0.0, %v1335
        %v1337 = vpop.f32.mrf.mxu0
        %v1338 = vadd.f32 0.0, %v1337
        %1339 = vdwg.mxu0
        %1340 = vmatpush.bf16.msra.mxu0 %v1109
        %1341 = vmatpush.bf16.msra.mxu0 %v1101
        %1342 = vmatpush.bf16.msra.mxu0 %v1093
        %1343 = vmatpush.bf16.msra.mxu0 %v1085
        %1344 = vmatpush.bf16.msra.mxu0 %v1077
        %1345 = vmatpush.bf16.msra.mxu0 %v1069
        %1346 = vmatpush.bf16.msra.mxu0 %v1061
        %1347 = vmatpush.bf16.msra.mxu0 %v1053
        %1348 = vmatmul.bf16.gmra.mxu0 %v599
        %v1349 = vpop.f32.mrf.mxu0
        %v1350 = vadd.f32 %v1336, %v1349
        %v1351 = vpop.f32.mrf.mxu0
        %v1352 = vadd.f32 %v1338, %v1351
        %1353 = vdwg.mxu0
        %1354 = vmatpush.bf16.msra.mxu0 %v1046
        %1355 = vmatpush.bf16.msra.mxu0 %v1038
        %1356 = vmatpush.bf16.msra.mxu0 %v1030
        %1357 = vmatpush.bf16.msra.mxu0 %v1022
        %1358 = vmatpush.bf16.msra.mxu0 %v1014
        %1359 = vmatpush.bf16.msra.mxu0 %v1006
        %1360 = vmatpush.bf16.msra.mxu0 %v998
        %1361 = vmatpush.bf16.msra.mxu0 %v990
        %1362 = vmatmul.bf16.gmra.mxu0 %v598
        %v1363 = vpop.f32.mrf.mxu0
        %v1364 = vadd.f32 0.0, %v1363
        %v1365 = vpop.f32.mrf.mxu0
        %v1366 = vadd.f32 0.0, %v1365
        %1367 = vdwg.mxu0
        %1368 = vmatpush.bf16.msra.mxu0 %v1110
        %1369 = vmatpush.bf16.msra.mxu0 %v1102
        %1370 = vmatpush.bf16.msra.mxu0 %v1094
        %1371 = vmatpush.bf16.msra.mxu0 %v1086
        %1372 = vmatpush.bf16.msra.mxu0 %v1078
        %1373 = vmatpush.bf16.msra.mxu0 %v1070
        %1374 = vmatpush.bf16.msra.mxu0 %v1062
        %1375 = vmatpush.bf16.msra.mxu0 %v1054
        %1376 = vmatmul.bf16.gmra.mxu0 %v599
        %v1377 = vpop.f32.mrf.mxu0
        %v1378 = vadd.f32 %v1364, %v1377
        %v1379 = vpop.f32.mrf.mxu0
        %v1380 = vadd.f32 %v1366, %v1379
        %1381 = vdwg.mxu0
        %1382 = vmatpush.bf16.msra.mxu0 %v1047
        %1383 = vmatpush.bf16.msra.mxu0 %v1039
        %1384 = vmatpush.bf16.msra.mxu0 %v1031
        %1385 = vmatpush.bf16.msra.mxu0 %v1023
        %1386 = vmatpush.bf16.msra.mxu0 %v1015
        %1387 = vmatpush.bf16.msra.mxu0 %v1007
        %1388 = vmatpush.bf16.msra.mxu0 %v999
        %1389 = vmatpush.bf16.msra.mxu0 %v991
        %1390 = vmatmul.bf16.gmra.mxu0 %v598
        %v1391 = vpop.f32.mrf.mxu0
        %v1392 = vadd.f32 0.0, %v1391
        %v1393 = vpop.f32.mrf.mxu0
        %v1394 = vadd.f32 0.0, %v1393
        %1395 = vdwg.mxu0
        %1396 = vmatpush.bf16.msra.mxu0 %v1111
        %1397 = vmatpush.bf16.msra.mxu0 %v1103
        %1398 = vmatpush.bf16.msra.mxu0 %v1095
        %1399 = vmatpush.bf16.msra.mxu0 %v1087
        %1400 = vmatpush.bf16.msra.mxu0 %v1079
        %1401 = vmatpush.bf16.msra.mxu0 %v1071
        %1402 = vmatpush.bf16.msra.mxu0 %v1063
        %1403 = vmatpush.bf16.msra.mxu0 %v1055
        %1404 = vmatmul.bf16.gmra.mxu0 %v599
        %v1405 = vpop.f32.mrf.mxu0
        %v1406 = vadd.f32 %v1392, %v1405
        %v1407 = vpop.f32.mrf.mxu0
        %v1408 = vadd.f32 %v1394, %v1407
        %1409 = vdwg.mxu0
        %1410 = vmatpush.bf16.msra.mxu0 %v1048
        %1411 = vmatpush.bf16.msra.mxu0 %v1040
        %1412 = vmatpush.bf16.msra.mxu0 %v1032
        %1413 = vmatpush.bf16.msra.mxu0 %v1024
        %1414 = vmatpush.bf16.msra.mxu0 %v1016
        %1415 = vmatpush.bf16.msra.mxu0 %v1008
        %1416 = vmatpush.bf16.msra.mxu0 %v1000
        %1417 = vmatpush.bf16.msra.mxu0 %v992
        %1418 = vmatmul.bf16.gmra.mxu0 %v598
        %v1419 = vpop.f32.mrf.mxu0
        %v1420 = vadd.f32 0.0, %v1419
        %v1421 = vpop.f32.mrf.mxu0
        %v1422 = vadd.f32 0.0, %v1421
        %1423 = vdwg.mxu0
        %1424 = vmatpush.bf16.msra.mxu0 %v1112
        %1425 = vmatpush.bf16.msra.mxu0 %v1104
        %1426 = vmatpush.bf16.msra.mxu0 %v1096
        %1427 = vmatpush.bf16.msra.mxu0 %v1088
        %1428 = vmatpush.bf16.msra.mxu0 %v1080
        %1429 = vmatpush.bf16.msra.mxu0 %v1072
        %1430 = vmatpush.bf16.msra.mxu0 %v1064
        %1431 = vmatpush.bf16.msra.mxu0 %v1056
        %1432 = vmatmul.bf16.gmra.mxu0 %v599
        %v1433 = vpop.f32.mrf.mxu0
        %v1434 = vadd.f32 %v1420, %v1433
        %v1435 = vpop.f32.mrf.mxu0
        %v1436 = vadd.f32 %v1422, %v1435
        %1437 = vdwg.mxu0
        %1438 = vmatpush.bf16.msra.mxu0 %v1049
        %1439 = vmatpush.bf16.msra.mxu0 %v1041
        %1440 = vmatpush.bf16.msra.mxu0 %v1033
        %1441 = vmatpush.bf16.msra.mxu0 %v1025
        %1442 = vmatpush.bf16.msra.mxu0 %v1017
        %1443 = vmatpush.bf16.msra.mxu0 %v1009
        %1444 = vmatpush.bf16.msra.mxu0 %v1001
        %1445 = vmatpush.bf16.msra.mxu0 %v993
        %1446 = vmatmul.bf16.gmra.mxu0 %v598
        %v1447 = vpop.f32.mrf.mxu0
        %v1448 = vadd.f32 0.0, %v1447
        %v1449 = vpop.f32.mrf.mxu0
        %v1450 = vadd.f32 0.0, %v1449
        %1451 = vdwg.mxu0
        %1452 = vmatpush.bf16.msra.mxu0 %v1113
        %1453 = vmatpush.bf16.msra.mxu0 %v1105
        %1454 = vmatpush.bf16.msra.mxu0 %v1097
        %1455 = vmatpush.bf16.msra.mxu0 %v1089
        %1456 = vmatpush.bf16.msra.mxu0 %v1081
        %1457 = vmatpush.bf16.msra.mxu0 %v1073
        %1458 = vmatpush.bf16.msra.mxu0 %v1065
        %1459 = vmatpush.bf16.msra.mxu0 %v1057
        %1460 = vmatmul.bf16.gmra.mxu0 %v599
        %v1461 = vpop.f32.mrf.mxu0
        %v1462 = vadd.f32 %v1448, %v1461
        %v1463 = vpop.f32.mrf.mxu0
        %v1464 = vadd.f32 %v1450, %v1463
        %1465 = vdwg.mxu0
        %v1466 = vadd.f32 %v446, %v1266
        %v1467 = vadd.f32 %v447, %v1294
        %v1468 = vadd.f32 %v448, %v1322
        %v1469 = vadd.f32 %v449, %v1350
        %v1470 = vadd.f32 %v450, %v1378
        %v1471 = vadd.f32 %v451, %v1406
        %v1472 = vadd.f32 %v452, %v1434
        %v1473 = vadd.f32 %v453, %v1462
        %v1474 = vadd.f32 %v454, %v1268
        %v1475 = vadd.f32 %v455, %v1296
        %v1476 = vadd.f32 %v456, %v1324
        %v1477 = vadd.f32 %v457, %v1352
        %v1478 = vadd.f32 %v458, %v1380
        %v1479 = vadd.f32 %v459, %v1408
        %v1480 = vadd.f32 %v460, %v1436
        %v1481 = vadd.f32 %v461, %v1464
        %1482 = vst [vmem:[#allocation2] sm:$0xff] %v1466
        %1483 = vst [vmem:[#allocation2 + $0x8] sm:$0xff] %v1467
        %1484 = vst [vmem:[#allocation2 + $0x10] sm:$0xff] %v1468
        %1485 = vst [vmem:[#allocation2 + $0x18] sm:$0xff] %v1469
        %1486 = vst [vmem:[#allocation2 + $0x20] sm:$0xff] %v1470
        %1487 = vst [vmem:[#allocation2 + $0x28] sm:$0xff] %v1471
        %1488 = vst [vmem:[#allocation2 + $0x30] sm:$0xff] %v1472
        %1489 = vst [vmem:[#allocation2 + $0x38] sm:$0xff] %v1473
        %1490 = vst [vmem:[#allocation2 + $0x40] sm:$0xff] %v1474
        %1491 = vst [vmem:[#allocation2 + $0x48] sm:$0xff] %v1475
        %1492 = vst [vmem:[#allocation2 + $0x50] sm:$0xff] %v1476
        %1493 = vst [vmem:[#allocation2 + $0x58] sm:$0xff] %v1477
        %1494 = vst [vmem:[#allocation2 + $0x60] sm:$0xff] %v1478
        %1495 = vst [vmem:[#allocation2 + $0x68] sm:$0xff] %v1479
        %1496 = vst [vmem:[#allocation2 + $0x70] sm:$0xff] %v1480
        %1497 = vst [vmem:[#allocation2 + $0x78] sm:$0xff] %v1481
        %p1498 = scmp.eq.s32.totalorder %s24, 2
        // Predicated region
        $region115: #{_lambda_.1} parent=81 // pred_check
          %p1499 = pneg %p1498
        $region116: #{_lambda_.1} parent=81 // pred_check_branch
          %1501 = sbr.rel (%p1499) target = $region118
        $region117: #{_lambda_.1} parent=81 // pred_region
          %v1502 = vld [vmem:[#allocation2] sm:$0xff]
          %v1503 = vld [vmem:[#allocation2 + $0x8] sm:$0xff]
          %v1504 = vld [vmem:[#allocation2 + $0x10] sm:$0xff]
          %v1505 = vld [vmem:[#allocation2 + $0x18] sm:$0xff]
          %v1506 = vld [vmem:[#allocation2 + $0x20] sm:$0xff]
          %v1507 = vld [vmem:[#allocation2 + $0x28] sm:$0xff]
          %v1508 = vld [vmem:[#allocation2 + $0x30] sm:$0xff]
          %v1509 = vld [vmem:[#allocation2 + $0x38] sm:$0xff]
          %v1510 = vld [vmem:[#allocation2 + $0x40] sm:$0xff]
          %v1511 = vld [vmem:[#allocation2 + $0x48] sm:$0xff]
          %v1512 = vld [vmem:[#allocation2 + $0x50] sm:$0xff]
          %v1513 = vld [vmem:[#allocation2 + $0x58] sm:$0xff]
          %v1514 = vld [vmem:[#allocation2 + $0x60] sm:$0xff]
          %v1515 = vld [vmem:[#allocation2 + $0x68] sm:$0xff]
          %v1516 = vld [vmem:[#allocation2 + $0x70] sm:$0xff]
          %v1517 = vld [vmem:[#allocation2 + $0x78] sm:$0xff]
          %v1518 = vld [vmem:[#allocation6] sm:$0xff]
          %v1520 = vperm.slane %v1518, 0
          %v1521 = vperm.slane %v1518, 1
          %v1522 = vperm.slane %v1518, 2
          %v1523 = vperm.slane %v1518, 3
          %v1524 = vperm.slane %v1518, 4
          %v1525 = vperm.slane %v1518, 5
          %v1526 = vperm.slane %v1518, 6
          %v1527 = vperm.slane %v1518, 7
          %v1536 = vadd.f32 %v1502, %v1520
          %v1537 = vadd.f32 %v1503, %v1521
          %v1538 = vadd.f32 %v1504, %v1522
          %v1539 = vadd.f32 %v1505, %v1523
          %v1540 = vadd.f32 %v1506, %v1524
          %v1541 = vadd.f32 %v1507, %v1525
          %v1542 = vadd.f32 %v1508, %v1526
          %v1543 = vadd.f32 %v1509, %v1527
          %v1544 = vadd.f32 %v1510, %v1520
          %v1545 = vadd.f32 %v1511, %v1521
          %v1546 = vadd.f32 %v1512, %v1522
          %v1547 = vadd.f32 %v1513, %v1523
          %v1548 = vadd.f32 %v1514, %v1524
          %v1549 = vadd.f32 %v1515, %v1525
          %v1550 = vadd.f32 %v1516, %v1526
          %v1551 = vadd.f32 %v1517, %v1527
          %v1552 = vmax.f32 %v1536, 0.0
          %v1553 = vmax.f32 %v1537, 0.0
          %v1554 = vmax.f32 %v1538, 0.0
          %v1555 = vmax.f32 %v1539, 0.0
          %v1556 = vmax.f32 %v1540, 0.0
          %v1557 = vmax.f32 %v1541, 0.0
          %v1558 = vmax.f32 %v1542, 0.0
          %v1559 = vmax.f32 %v1543, 0.0
          %v1560 = vmax.f32 %v1544, 0.0
          %v1561 = vmax.f32 %v1545, 0.0
          %v1562 = vmax.f32 %v1546, 0.0
          %v1563 = vmax.f32 %v1547, 0.0
          %v1564 = vmax.f32 %v1548, 0.0
          %v1565 = vmax.f32 %v1549, 0.0
          %v1566 = vmax.f32 %v1550, 0.0
          %v1567 = vmax.f32 %v1551, 0.0
          %v1568 = vld [vmem:[#allocation8] sm:$0xff]
          %v1569 = vld [vmem:[#allocation8 + $0x8] sm:$0xff]
          %v1570 = vld [vmem:[#allocation8 + $0x10] sm:$0xff]
          %v1571 = vld [vmem:[#allocation8 + $0x18] sm:$0xff]
          %v1572 = vld [vmem:[#allocation8 + $0x20] sm:$0xff]
          %v1573 = vld [vmem:[#allocation8 + $0x28] sm:$0xff]
          %v1574 = vld [vmem:[#allocation8 + $0x30] sm:$0xff]
          %v1575 = vld [vmem:[#allocation8 + $0x38] sm:$0xff]
          %v1576 = vld [vmem:[#allocation8 + $0x40] sm:$0xff]
          %v1577 = vld [vmem:[#allocation8 + $0x48] sm:$0xff]
          %v1578 = vld [vmem:[#allocation8 + $0x50] sm:$0xff]
          %v1579 = vld [vmem:[#allocation8 + $0x58] sm:$0xff]
          %v1580 = vld [vmem:[#allocation8 + $0x60] sm:$0xff]
          %v1581 = vld [vmem:[#allocation8 + $0x68] sm:$0xff]
          %v1582 = vld [vmem:[#allocation8 + $0x70] sm:$0xff]
          %v1583 = vld [vmem:[#allocation8 + $0x78] sm:$0xff]
          %v1584 = vld [vmem:[#allocation8 + $0x80] sm:$0xff]
          %v1585 = vld [vmem:[#allocation8 + $0x88] sm:$0xff]
          %v1586 = vld [vmem:[#allocation8 + $0x90] sm:$0xff]
          %v1587 = vld [vmem:[#allocation8 + $0x98] sm:$0xff]
          %v1588 = vld [vmem:[#allocation8 + $0xa0] sm:$0xff]
          %v1589 = vld [vmem:[#allocation8 + $0xa8] sm:$0xff]
          %v1590 = vld [vmem:[#allocation8 + $0xb0] sm:$0xff]
          %v1591 = vld [vmem:[#allocation8 + $0xb8] sm:$0xff]
          %v1592 = vld [vmem:[#allocation8 + $0xc0] sm:$0xff]
          %v1593 = vld [vmem:[#allocation8 + $0xc8] sm:$0xff]
          %v1594 = vld [vmem:[#allocation8 + $0xd0] sm:$0xff]
          %v1595 = vld [vmem:[#allocation8 + $0xd8] sm:$0xff]
          %v1596 = vld [vmem:[#allocation8 + $0xe0] sm:$0xff]
          %v1597 = vld [vmem:[#allocation8 + $0xe8] sm:$0xff]
          %v1598 = vld [vmem:[#allocation8 + $0xf0] sm:$0xff]
          %v1599 = vld [vmem:[#allocation8 + $0xf8] sm:$0xff]
          %v1600 = vld [vmem:[#allocation8 + $0x100] sm:$0xff]
          %v1601 = vld [vmem:[#allocation8 + $0x108] sm:$0xff]
          %v1602 = vld [vmem:[#allocation8 + $0x110] sm:$0xff]
          %v1603 = vld [vmem:[#allocation8 + $0x118] sm:$0xff]
          %v1604 = vld [vmem:[#allocation8 + $0x120] sm:$0xff]
          %v1605 = vld [vmem:[#allocation8 + $0x128] sm:$0xff]
          %v1606 = vld [vmem:[#allocation8 + $0x130] sm:$0xff]
          %v1607 = vld [vmem:[#allocation8 + $0x138] sm:$0xff]
          %v1608 = vld [vmem:[#allocation8 + $0x140] sm:$0xff]
          %v1609 = vld [vmem:[#allocation8 + $0x148] sm:$0xff]
          %v1610 = vld [vmem:[#allocation8 + $0x150] sm:$0xff]
          %v1611 = vld [vmem:[#allocation8 + $0x158] sm:$0xff]
          %v1612 = vld [vmem:[#allocation8 + $0x160] sm:$0xff]
          %v1613 = vld [vmem:[#allocation8 + $0x168] sm:$0xff]
          %v1614 = vld [vmem:[#allocation8 + $0x170] sm:$0xff]
          %v1615 = vld [vmem:[#allocation8 + $0x178] sm:$0xff]
          %v1616 = vld [vmem:[#allocation8 + $0x180] sm:$0xff]
          %v1617 = vld [vmem:[#allocation8 + $0x188] sm:$0xff]
          %v1618 = vld [vmem:[#allocation8 + $0x190] sm:$0xff]
          %v1619 = vld [vmem:[#allocation8 + $0x198] sm:$0xff]
          %v1620 = vld [vmem:[#allocation8 + $0x1a0] sm:$0xff]
          %v1621 = vld [vmem:[#allocation8 + $0x1a8] sm:$0xff]
          %v1622 = vld [vmem:[#allocation8 + $0x1b0] sm:$0xff]
          %v1623 = vld [vmem:[#allocation8 + $0x1b8] sm:$0xff]
          %v1624 = vld [vmem:[#allocation8 + $0x1c0] sm:$0xff]
          %v1625 = vld [vmem:[#allocation8 + $0x1c8] sm:$0xff]
          %v1626 = vld [vmem:[#allocation8 + $0x1d0] sm:$0xff]
          %v1627 = vld [vmem:[#allocation8 + $0x1d8] sm:$0xff]
          %v1628 = vld [vmem:[#allocation8 + $0x1e0] sm:$0xff]
          %v1629 = vld [vmem:[#allocation8 + $0x1e8] sm:$0xff]
          %v1630 = vld [vmem:[#allocation8 + $0x1f0] sm:$0xff]
          %v1631 = vld [vmem:[#allocation8 + $0x1f8] sm:$0xff]
          %v1632 = vld [vmem:[#allocation8 + $0x200] sm:$0xff]
          %v1633 = vld [vmem:[#allocation8 + $0x208] sm:$0xff]
          %v1634 = vld [vmem:[#allocation8 + $0x210] sm:$0xff]
          %v1635 = vld [vmem:[#allocation8 + $0x218] sm:$0xff]
          %v1636 = vld [vmem:[#allocation8 + $0x220] sm:$0xff]
          %v1637 = vld [vmem:[#allocation8 + $0x228] sm:$0xff]
          %v1638 = vld [vmem:[#allocation8 + $0x230] sm:$0xff]
          %v1639 = vld [vmem:[#allocation8 + $0x238] sm:$0xff]
          %v1640 = vld [vmem:[#allocation8 + $0x240] sm:$0xff]
          %v1641 = vld [vmem:[#allocation8 + $0x248] sm:$0xff]
          %v1642 = vld [vmem:[#allocation8 + $0x250] sm:$0xff]
          %v1643 = vld [vmem:[#allocation8 + $0x258] sm:$0xff]
          %v1644 = vld [vmem:[#allocation8 + $0x260] sm:$0xff]
          %v1645 = vld [vmem:[#allocation8 + $0x268] sm:$0xff]
          %v1646 = vld [vmem:[#allocation8 + $0x270] sm:$0xff]
          %v1647 = vld [vmem:[#allocation8 + $0x278] sm:$0xff]
          %v1648 = vld [vmem:[#allocation8 + $0x280] sm:$0xff]
          %v1649 = vld [vmem:[#allocation8 + $0x288] sm:$0xff]
          %v1650 = vld [vmem:[#allocation8 + $0x290] sm:$0xff]
          %v1651 = vld [vmem:[#allocation8 + $0x298] sm:$0xff]
          %v1652 = vld [vmem:[#allocation8 + $0x2a0] sm:$0xff]
          %v1653 = vld [vmem:[#allocation8 + $0x2a8] sm:$0xff]
          %v1654 = vld [vmem:[#allocation8 + $0x2b0] sm:$0xff]
          %v1655 = vld [vmem:[#allocation8 + $0x2b8] sm:$0xff]
          %v1656 = vld [vmem:[#allocation8 + $0x2c0] sm:$0xff]
          %v1657 = vld [vmem:[#allocation8 + $0x2c8] sm:$0xff]
          %v1658 = vld [vmem:[#allocation8 + $0x2d0] sm:$0xff]
          %v1659 = vld [vmem:[#allocation8 + $0x2d8] sm:$0xff]
          %v1660 = vld [vmem:[#allocation8 + $0x2e0] sm:$0xff]
          %v1661 = vld [vmem:[#allocation8 + $0x2e8] sm:$0xff]
          %v1662 = vld [vmem:[#allocation8 + $0x2f0] sm:$0xff]
          %v1663 = vld [vmem:[#allocation8 + $0x2f8] sm:$0xff]
          %v1664 = vld [vmem:[#allocation8 + $0x300] sm:$0xff]
          %v1665 = vld [vmem:[#allocation8 + $0x308] sm:$0xff]
          %v1666 = vld [vmem:[#allocation8 + $0x310] sm:$0xff]
          %v1667 = vld [vmem:[#allocation8 + $0x318] sm:$0xff]
          %v1668 = vld [vmem:[#allocation8 + $0x320] sm:$0xff]
          %v1669 = vld [vmem:[#allocation8 + $0x328] sm:$0xff]
          %v1670 = vld [vmem:[#allocation8 + $0x330] sm:$0xff]
          %v1671 = vld [vmem:[#allocation8 + $0x338] sm:$0xff]
          %v1672 = vld [vmem:[#allocation8 + $0x340] sm:$0xff]
          %v1673 = vld [vmem:[#allocation8 + $0x348] sm:$0xff]
          %v1674 = vld [vmem:[#allocation8 + $0x350] sm:$0xff]
          %v1675 = vld [vmem:[#allocation8 + $0x358] sm:$0xff]
          %v1676 = vld [vmem:[#allocation8 + $0x360] sm:$0xff]
          %v1677 = vld [vmem:[#allocation8 + $0x368] sm:$0xff]
          %v1678 = vld [vmem:[#allocation8 + $0x370] sm:$0xff]
          %v1679 = vld [vmem:[#allocation8 + $0x378] sm:$0xff]
          %v1680 = vld [vmem:[#allocation8 + $0x380] sm:$0xff]
          %v1681 = vld [vmem:[#allocation8 + $0x388] sm:$0xff]
          %v1682 = vld [vmem:[#allocation8 + $0x390] sm:$0xff]
          %v1683 = vld [vmem:[#allocation8 + $0x398] sm:$0xff]
          %v1684 = vld [vmem:[#allocation8 + $0x3a0] sm:$0xff]
          %v1685 = vld [vmem:[#allocation8 + $0x3a8] sm:$0xff]
          %v1686 = vld [vmem:[#allocation8 + $0x3b0] sm:$0xff]
          %v1687 = vld [vmem:[#allocation8 + $0x3b8] sm:$0xff]
          %v1688 = vld [vmem:[#allocation8 + $0x3c0] sm:$0xff]
          %v1689 = vld [vmem:[#allocation8 + $0x3c8] sm:$0xff]
          %v1690 = vld [vmem:[#allocation8 + $0x3d0] sm:$0xff]
          %v1691 = vld [vmem:[#allocation8 + $0x3d8] sm:$0xff]
          %v1692 = vld [vmem:[#allocation8 + $0x3e0] sm:$0xff]
          %v1693 = vld [vmem:[#allocation8 + $0x3e8] sm:$0xff]
          %v1694 = vld [vmem:[#allocation8 + $0x3f0] sm:$0xff]
          %v1695 = vld [vmem:[#allocation8 + $0x3f8] sm:$0xff]
          %v1696 = vld [vmem:[#allocation9] sm:$0x1]
          %v1698 = vperm.slane %v1696, 0
          %1700 = vmatpush.msra.mxu0 %v1583
          %1701 = vmatpush.msra.mxu0 %v1582
          %1702 = vmatpush.msra.mxu0 %v1581
          %1703 = vmatpush.msra.mxu0 %v1580
          %1704 = vmatpush.msra.mxu0 %v1579
          %1705 = vmatpush.msra.mxu0 %v1578
          %1706 = vmatpush.msra.mxu0 %v1577
          %1707 = vmatpush.msra.mxu0 %v1576
          %1708 = vmatpush.msra.mxu0 %v1575
          %1709 = vmatpush.msra.mxu0 %v1574
          %1710 = vmatpush.msra.mxu0 %v1573
          %1711 = vmatpush.msra.mxu0 %v1572
          %1712 = vmatpush.msra.mxu0 %v1571
          %1713 = vmatpush.msra.mxu0 %v1570
          %1714 = vmatpush.msra.mxu0 %v1569
          %1715 = vmatpush.msra.mxu0 %v1568
          %1716 = vmatmul.f32.gmra.mxu0 %v1552
          %v1717 = vpop.f32.mrf.mxu0
          %v1718 = vadd.f32 %v1698, %v1717
          %1719 = vmatmul.f32.gmra.mxu0 %v1560
          %v1720 = vpop.f32.mrf.mxu0
          %v1721 = vadd.f32 %v1698, %v1720
          %1722 = vdwg.mxu0
          %1723 = vmatpush.msra.mxu0 %v1599
          %1724 = vmatpush.msra.mxu0 %v1598
          %1725 = vmatpush.msra.mxu0 %v1597
          %1726 = vmatpush.msra.mxu0 %v1596
          %1727 = vmatpush.msra.mxu0 %v1595
          %1728 = vmatpush.msra.mxu0 %v1594
          %1729 = vmatpush.msra.mxu0 %v1593
          %1730 = vmatpush.msra.mxu0 %v1592
          %1731 = vmatpush.msra.mxu0 %v1591
          %1732 = vmatpush.msra.mxu0 %v1590
          %1733 = vmatpush.msra.mxu0 %v1589
          %1734 = vmatpush.msra.mxu0 %v1588
          %1735 = vmatpush.msra.mxu0 %v1587
          %1736 = vmatpush.msra.mxu0 %v1586
          %1737 = vmatpush.msra.mxu0 %v1585
          %1738 = vmatpush.msra.mxu0 %v1584
          %1739 = vmatmul.f32.gmra.mxu0 %v1553
          %v1740 = vpop.f32.mrf.mxu0
          %v1741 = vadd.f32 %v1718, %v1740
          %1742 = vmatmul.f32.gmra.mxu0 %v1561
          %v1743 = vpop.f32.mrf.mxu0
          %v1744 = vadd.f32 %v1721, %v1743
          %1745 = vdwg.mxu0
          %1746 = vmatpush.msra.mxu0 %v1615
          %1747 = vmatpush.msra.mxu0 %v1614
          %1748 = vmatpush.msra.mxu0 %v1613
          %1749 = vmatpush.msra.mxu0 %v1612
          %1750 = vmatpush.msra.mxu0 %v1611
          %1751 = vmatpush.msra.mxu0 %v1610
          %1752 = vmatpush.msra.mxu0 %v1609
          %1753 = vmatpush.msra.mxu0 %v1608
          %1754 = vmatpush.msra.mxu0 %v1607
          %1755 = vmatpush.msra.mxu0 %v1606
          %1756 = vmatpush.msra.mxu0 %v1605
          %1757 = vmatpush.msra.mxu0 %v1604
          %1758 = vmatpush.msra.mxu0 %v1603
          %1759 = vmatpush.msra.mxu0 %v1602
          %1760 = vmatpush.msra.mxu0 %v1601
          %1761 = vmatpush.msra.mxu0 %v1600
          %1762 = vmatmul.f32.gmra.mxu0 %v1554
          %v1763 = vpop.f32.mrf.mxu0
          %v1764 = vadd.f32 %v1741, %v1763
          %1765 = vmatmul.f32.gmra.mxu0 %v1562
          %v1766 = vpop.f32.mrf.mxu0
          %v1767 = vadd.f32 %v1744, %v1766
          %1768 = vdwg.mxu0
          %1769 = vmatpush.msra.mxu0 %v1631
          %1770 = vmatpush.msra.mxu0 %v1630
          %1771 = vmatpush.msra.mxu0 %v1629
          %1772 = vmatpush.msra.mxu0 %v1628
          %1773 = vmatpush.msra.mxu0 %v1627
          %1774 = vmatpush.msra.mxu0 %v1626
          %1775 = vmatpush.msra.mxu0 %v1625
          %1776 = vmatpush.msra.mxu0 %v1624
          %1777 = vmatpush.msra.mxu0 %v1623
          %1778 = vmatpush.msra.mxu0 %v1622
          %1779 = vmatpush.msra.mxu0 %v1621
          %1780 = vmatpush.msra.mxu0 %v1620
          %1781 = vmatpush.msra.mxu0 %v1619
          %1782 = vmatpush.msra.mxu0 %v1618
          %1783 = vmatpush.msra.mxu0 %v1617
          %1784 = vmatpush.msra.mxu0 %v1616
          %1785 = vmatmul.f32.gmra.mxu0 %v1555
          %v1786 = vpop.f32.mrf.mxu0
          %v1787 = vadd.f32 %v1764, %v1786
          %1788 = vmatmul.f32.gmra.mxu0 %v1563
          %v1789 = vpop.f32.mrf.mxu0
          %v1790 = vadd.f32 %v1767, %v1789
          %1791 = vdwg.mxu0
          %1792 = vmatpush.msra.mxu0 %v1647
          %1793 = vmatpush.msra.mxu0 %v1646
          %1794 = vmatpush.msra.mxu0 %v1645
          %1795 = vmatpush.msra.mxu0 %v1644
          %1796 = vmatpush.msra.mxu0 %v1643
          %1797 = vmatpush.msra.mxu0 %v1642
          %1798 = vmatpush.msra.mxu0 %v1641
          %1799 = vmatpush.msra.mxu0 %v1640
          %1800 = vmatpush.msra.mxu0 %v1639
          %1801 = vmatpush.msra.mxu0 %v1638
          %1802 = vmatpush.msra.mxu0 %v1637
          %1803 = vmatpush.msra.mxu0 %v1636
          %1804 = vmatpush.msra.mxu0 %v1635
          %1805 = vmatpush.msra.mxu0 %v1634
          %1806 = vmatpush.msra.mxu0 %v1633
          %1807 = vmatpush.msra.mxu0 %v1632
          %1808 = vmatmul.f32.gmra.mxu0 %v1556
          %v1809 = vpop.f32.mrf.mxu0
          %v1810 = vadd.f32 %v1787, %v1809
          %1811 = vmatmul.f32.gmra.mxu0 %v1564
          %v1812 = vpop.f32.mrf.mxu0
          %v1813 = vadd.f32 %v1790, %v1812
          %1814 = vdwg.mxu0
          %1815 = vmatpush.msra.mxu0 %v1663
          %1816 = vmatpush.msra.mxu0 %v1662
          %1817 = vmatpush.msra.mxu0 %v1661
          %1818 = vmatpush.msra.mxu0 %v1660
          %1819 = vmatpush.msra.mxu0 %v1659
          %1820 = vmatpush.msra.mxu0 %v1658
          %1821 = vmatpush.msra.mxu0 %v1657
          %1822 = vmatpush.msra.mxu0 %v1656
          %1823 = vmatpush.msra.mxu0 %v1655
          %1824 = vmatpush.msra.mxu0 %v1654
          %1825 = vmatpush.msra.mxu0 %v1653
          %1826 = vmatpush.msra.mxu0 %v1652
          %1827 = vmatpush.msra.mxu0 %v1651
          %1828 = vmatpush.msra.mxu0 %v1650
          %1829 = vmatpush.msra.mxu0 %v1649
          %1830 = vmatpush.msra.mxu0 %v1648
          %1831 = vmatmul.f32.gmra.mxu0 %v1557
          %v1832 = vpop.f32.mrf.mxu0
          %v1833 = vadd.f32 %v1810, %v1832
          %1834 = vmatmul.f32.gmra.mxu0 %v1565
          %v1835 = vpop.f32.mrf.mxu0
          %v1836 = vadd.f32 %v1813, %v1835
          %1837 = vdwg.mxu0
          %1838 = vmatpush.msra.mxu0 %v1679
          %1839 = vmatpush.msra.mxu0 %v1678
          %1840 = vmatpush.msra.mxu0 %v1677
          %1841 = vmatpush.msra.mxu0 %v1676
          %1842 = vmatpush.msra.mxu0 %v1675
          %1843 = vmatpush.msra.mxu0 %v1674
          %1844 = vmatpush.msra.mxu0 %v1673
          %1845 = vmatpush.msra.mxu0 %v1672
          %1846 = vmatpush.msra.mxu0 %v1671
          %1847 = vmatpush.msra.mxu0 %v1670
          %1848 = vmatpush.msra.mxu0 %v1669
          %1849 = vmatpush.msra.mxu0 %v1668
          %1850 = vmatpush.msra.mxu0 %v1667
          %1851 = vmatpush.msra.mxu0 %v1666
          %1852 = vmatpush.msra.mxu0 %v1665
          %1853 = vmatpush.msra.mxu0 %v1664
          %1854 = vmatmul.f32.gmra.mxu0 %v1558
          %v1855 = vpop.f32.mrf.mxu0
          %v1856 = vadd.f32 %v1833, %v1855
          %1857 = vmatmul.f32.gmra.mxu0 %v1566
          %v1858 = vpop.f32.mrf.mxu0
          %v1859 = vadd.f32 %v1836, %v1858
          %1860 = vdwg.mxu0
          %1861 = vmatpush.msra.mxu0 %v1695
          %1862 = vmatpush.msra.mxu0 %v1694
          %1863 = vmatpush.msra.mxu0 %v1693
          %1864 = vmatpush.msra.mxu0 %v1692
          %1865 = vmatpush.msra.mxu0 %v1691
          %1866 = vmatpush.msra.mxu0 %v1690
          %1867 = vmatpush.msra.mxu0 %v1689
          %1868 = vmatpush.msra.mxu0 %v1688
          %1869 = vmatpush.msra.mxu0 %v1687
          %1870 = vmatpush.msra.mxu0 %v1686
          %1871 = vmatpush.msra.mxu0 %v1685
          %1872 = vmatpush.msra.mxu0 %v1684
          %1873 = vmatpush.msra.mxu0 %v1683
          %1874 = vmatpush.msra.mxu0 %v1682
          %1875 = vmatpush.msra.mxu0 %v1681
          %1876 = vmatpush.msra.mxu0 %v1680
          %1877 = vmatmul.f32.gmra.mxu0 %v1559
          %v1878 = vpop.f32.mrf.mxu0
          %v1879 = vadd.f32 %v1856, %v1878
          %1880 = vmatmul.f32.gmra.mxu0 %v1567
          %v1881 = vpop.f32.mrf.mxu0
          %v1882 = vadd.f32 %v1859, %v1881
          %1883 = vdwg.mxu0
          %v1884 = vld [vmem:[#allocation11] sm:$0xff]
          %v1885 = vld [vmem:[#allocation11 + $0x8] sm:$0xff]
          %v1886 = vld [vmem:[#allocation11 + $0x10] sm:$0xff]
          %v1887 = vld [vmem:[#allocation11 + $0x18] sm:$0xff]
          %v1888 = vld [vmem:[#allocation11 + $0x20] sm:$0xff]
          %v1889 = vld [vmem:[#allocation11 + $0x28] sm:$0xff]
          %v1890 = vld [vmem:[#allocation11 + $0x30] sm:$0xff]
          %v1891 = vld [vmem:[#allocation11 + $0x38] sm:$0xff]
          %v1892 = vld [vmem:[#allocation11 + $0x40] sm:$0xff]
          %v1893 = vld [vmem:[#allocation11 + $0x48] sm:$0xff]
          %v1894 = vld [vmem:[#allocation11 + $0x50] sm:$0xff]
          %v1895 = vld [vmem:[#allocation11 + $0x58] sm:$0xff]
          %v1896 = vld [vmem:[#allocation11 + $0x60] sm:$0xff]
          %v1897 = vld [vmem:[#allocation11 + $0x68] sm:$0xff]
          %v1898 = vld [vmem:[#allocation11 + $0x70] sm:$0xff]
          %v1899 = vld [vmem:[#allocation11 + $0x78] sm:$0xff]
          %v1900 = vld [vmem:[#allocation12] sm:$0x1]
          %v1902 = vperm.slane %v1900, 0
          %1904 = vmatpush.msra.mxu0 %v1899
          %1905 = vmatpush.msra.mxu0 %v1898
          %1906 = vmatpush.msra.mxu0 %v1897
          %1907 = vmatpush.msra.mxu0 %v1896
          %1908 = vmatpush.msra.mxu0 %v1895
          %1909 = vmatpush.msra.mxu0 %v1894
          %1910 = vmatpush.msra.mxu0 %v1893
          %1911 = vmatpush.msra.mxu0 %v1892
          %1912 = vmatpush.msra.mxu0 %v1891
          %1913 = vmatpush.msra.mxu0 %v1890
          %1914 = vmatpush.msra.mxu0 %v1889
          %1915 = vmatpush.msra.mxu0 %v1888
          %1916 = vmatpush.msra.mxu0 %v1887
          %1917 = vmatpush.msra.mxu0 %v1886
          %1918 = vmatpush.msra.mxu0 %v1885
          %1919 = vmatpush.msra.mxu0 %v1884
          %1920 = vmatmul.f32.gmra.mxu0 %v1879
          %v1921 = vpop.f32.mrf.mxu0
          %v1922 = vadd.f32 %v1902, %v1921
          %1923 = vmatmul.f32.gmra.mxu0 %v1882
          %v1924 = vpop.f32.mrf.mxu0
          %v1925 = vadd.f32 %v1902, %v1924
          %1926 = vdwg.mxu0
          %1927 = vst [vmem:[%s7] sm:$0xff] %v1922
          %1928 = vst [vmem:[%s7 + $0x8] sm:$0xff] %v1925
        $region118: #{_lambda_.1} parent=81 // pred_fallthru
          _
        // Predicated region
        $region119: #{_lambda_.1} parent=81 // pred_check
          %p1929 = pneg %p194
        $region120: #{_lambda_.1} parent=81 // pred_check_branch
          %1931 = sbr.rel (%p1929) target = $region122
        $region121: #{_lambda_.1} parent=81 // pred_region
          _
        $region122: #{_lambda_.1} parent=81 // pred_fallthru
          _
        // Predicated region
        $region123: #{_lambda_.1} parent=81 // pred_check
          %p1932 = pneg %p194
        $region124: #{_lambda_.1} parent=81 // pred_check_branch
          %1934 = sbr.rel (%p1932) target = $region126
        $region125: #{_lambda_.1} parent=81 // pred_region
          _
        $region126: #{_lambda_.1} parent=81 // pred_fallthru
          _
      $region82: #{_lambda_.1} parent=5 // pred_fallthru
        _
      %p1935 = scmp.le.s32.totalorder 2, %s19
      // Predicated region
      $region127: #{_lambda_.1} parent=5 // pred_check
        %p1936 = pneg %p1935
      $region128: #{_lambda_.1} parent=5 // pred_check_branch
        %1938 = sbr.rel (%p1936) target = $region130
      $region129: #{_lambda_.1} parent=5 // pred_region
        %s1939 = ssub.s32 %s19, 2
      $region130: #{_lambda_.1} parent=5 // pred_fallthru
        _
    $region6: #{_lambda_.1} parent=1 // loop_footer
      %s23 = sadd.s32 1, %s19
    $region7: #{_lambda_.1} parent=1 // loop_footer_branch
      %18 = sbr.rel target = $region3
    $region8: #{_lambda_.1} parent=1 // loop_exit
      _
    %1940 = vsyncpa [#allocation5], 1
    %s1941 = scalar_lea.sflag [#allocation5], 1
    %1942 = vsyncpa %s1941, 1
    %1943 = vsyncpa [#allocation7], 1
    %1944 = vsyncpa [#allocation10], 1
    %1945 = vsyncpa [#allocation13], 1

</llo_original>
